<compile_context>
chip_gen: v6e
topology: v6e:2x2x1
jax: 0.10.0
libtpu: 0.0.40
codegen_flags: <defaults>
</compile_context>

<pallas_src>
import functools

import jax
import jax.numpy as jnp
from jax import lax
from jax.experimental import pallas as pl
from jax.experimental.pallas import tpu as pltpu

EPS = 1e-5

NUM_BOND_TYPE = 5
NUM_BOND_DIRECTION = 3
NUM_ATOM_TYPE = 120
NUM_CHIRALITY_TAG = 3

LANE = 128


def _rup(x, m=LANE):
    return ((x + m - 1) // m) * m


def _vmem():
    return pl.BlockSpec(memory_space=pltpu.MemorySpace.VMEM)


def _pad_last(x, target):
    pad = [(0, 0)] * (x.ndim - 1) + [(0, target - x.shape[-1])]
    return jnp.pad(x, pad)


def _pad_last2(x, tr, tc):
    pad = ([(0, 0)] * (x.ndim - 2)
           + [(0, tr - x.shape[-2]), (0, tc - x.shape[-1])])
    return jnp.pad(x, pad)


# ---------------------------------------------------------------------------
# Fused kernel: all GINE layers + BatchNorm + ReLU + mean-pool + head.
#   per layer:  aggr = Adj @ h + agg_eemb_l
#               z    = relu(aggr @ W1 + b1) @ W2          (b2 dropped: no-op)
#               z    = BatchNorm(z) ; relu (except last layer)
#   head:       pooled = P @ h ; feat = pooled @ Wf + bf
#               out    = relu(feat @ Wo1 + bo1) @ Wo2 + bo2
# Matmul operands are bf16 (f32 accumulate); elementwise math stays f32.
# ---------------------------------------------------------------------------
def fused_ginet_kernel(h0_ref, adj_ref, aeemb_ref, w1_ref, w2_ref, lbn_ref,
                       pool_ref, wf_ref, wo1_ref, wo2_ref, hb_ref,
                       feat_ref, out_ref, *, num_layer, hp, dp, op):
    bf16 = jnp.bfloat16
    h = h0_ref[...]                       # (N, DP) f32
    adj = adj_ref[...]                    # (N, N)  bf16

    for l in range(num_layer):            # statically unrolled (small L)
        aggr = (jnp.dot(adj, h.astype(bf16), preferred_element_type=jnp.float32)
                + aeemb_ref[l].astype(jnp.float32))

        lbn = lbn_ref[l]                  # (3, WP) f32: [b1; gamma; beta]
        z = (jnp.dot(aggr.astype(bf16), w1_ref[l],
                     preferred_element_type=jnp.float32) + lbn[0:1, :hp])
        z = jnp.maximum(z, 0.0)
        z = jnp.dot(z.astype(bf16), w2_ref[l],
                    preferred_element_type=jnp.float32)
        # b2 of the second Linear is intentionally omitted: a per-column bias
        # added to every row is exactly cancelled by training-mode BN below.

        # BatchNorm1d over node axis (training stats, biased var), f32 VPU.
        mean = jnp.mean(z, axis=0, keepdims=True)
        var = jnp.maximum(
            jnp.mean(z * z, axis=0, keepdims=True) - mean * mean, 0.0)
        z = (z - mean) * lax.rsqrt(var + EPS)
        z = z * lbn[1:2, :dp] + lbn[2:3, :dp]

        if l != num_layer - 1:
            z = jnp.maximum(z, 0.0)
        h = z

    # global_mean_pool (tiny matmul, keep f32) + head.
    pooled = jnp.dot(pool_ref[...], h, preferred_element_type=jnp.float32)
    hb = hb_ref[...]                      # (3, FP) f32: [bf; bo1; bo2(padded)]
    feat = (jnp.dot(pooled.astype(bf16), wf_ref[...],
                    preferred_element_type=jnp.float32) + hb[0:1])
    feat_ref[...] = feat

    zz = (jnp.dot(feat.astype(bf16), wo1_ref[...],
                  preferred_element_type=jnp.float32) + hb[1:2])
    zz = jnp.maximum(zz, 0.0)
    out_ref[...] = (jnp.dot(zz.astype(bf16), wo2_ref[...],
                            preferred_element_type=jnp.float32) + hb[2:3, :op])


# ---------------------------------------------------------------------------
# Parameter construction (deterministic, synthetic — no checkpoint loading)
# ---------------------------------------------------------------------------
def xavier_uniform(key, shape):
    fan_in, fan_out = shape
    limit = (6.0 / (fan_in + fan_out)) ** 0.5
    return jax.random.uniform(key, shape, jnp.float32, -limit, limit)


def linear_params(key, fan_in, fan_out):
    kw, kb = jax.random.split(key)
    bound = 1.0 / (fan_in ** 0.5)
    w = jax.random.uniform(kw, (fan_in, fan_out), jnp.float32, -bound, bound)
    b = jax.random.uniform(kb, (1, fan_out), jnp.float32, -bound, bound)
    return w, b


def make_params(key, num_layer, emb_dim, feat_dim):
    keys = iter(jax.random.split(key, 8 + 8 * num_layer))
    params = {
        "x_emb1": xavier_uniform(next(keys), (NUM_ATOM_TYPE, emb_dim)),
        "x_emb2": xavier_uniform(next(keys), (NUM_CHIRALITY_TAG, emb_dim)),
        "layers": [],
    }
    for _ in range(num_layer):
        w1, b1 = linear_params(next(keys), emb_dim, 2 * emb_dim)
        w2, b2 = linear_params(next(keys), 2 * emb_dim, emb_dim)
        params["layers"].append({
            "edge_emb1": xavier_uniform(next(keys), (NUM_BOND_TYPE, emb_dim)),
            "edge_emb2": xavier_uniform(next(keys), (NUM_BOND_DIRECTION, emb_dim)),
            "w1": w1, "b1": b1, "w2": w2, "b2": b2,   # b2 unused (BN cancels it)
            "gamma": jnp.ones((1, emb_dim), jnp.float32),
            "beta": jnp.zeros((1, emb_dim), jnp.float32),
        })
    params["wf"], params["bf"] = linear_params(next(keys), emb_dim, feat_dim)
    params["wo1"], params["bo1"] = linear_params(next(keys), feat_dim, feat_dim)
    params["wo2"], params["bo2"] = linear_params(next(keys), feat_dim, feat_dim // 2)
    return params


# ---------------------------------------------------------------------------
# Full GINet forward: cheap one-time JAX preprocessing + ONE fused pallas_call
# ---------------------------------------------------------------------------
def ginet_forward(params, x_nodes, edge_index, edge_attr, batch, num_graphs,
                  num_layer, emb_dim, feat_dim):
    N = x_nodes.shape[0]
    DP = _rup(emb_dim)          # padded emb_dim
    HP = _rup(2 * emb_dim)      # padded hidden (2*emb_dim)
    FP = _rup(feat_dim)         # padded feat_dim
    OP = _rup(feat_dim // 2)    # padded feat_dim // 2
    WP = max(DP, HP)            # width of the packed per-layer bias/BN slab

    # Node embedding (integer gather stays in JAX glue).
    h0 = params["x_emb1"][x_nodes[:, 0]] + params["x_emb2"][x_nodes[:, 1]]

    # add_self_loops: append [i, i] edges with attr [4, 0].
    loops = jnp.arange(N, dtype=edge_index.dtype)
    ei = jnp.concatenate([edge_index, jnp.stack([loops, loops])], axis=1)
    sl_attr = jnp.concatenate(
        [jnp.full((N, 1), 4, edge_attr.dtype), jnp.zeros((N, 1), edge_attr.dtype)],
        axis=1)
    ea = jnp.concatenate([edge_attr, sl_attr], axis=0)

    # Layer-invariant dense adjacency: Adj[t, s] = #edges s -> t (small ints,
    # exactly representable in bf16).
    adj = jnp.zeros((N, N), jnp.float32).at[ei[1], ei[0]].add(1.0)

    # Per-layer aggregated edge term A @ eemb_l, batched across layers.
    e1 = jnp.stack([lp["edge_emb1"] for lp in params["layers"]])   # (L, 5, D)
    e2 = jnp.stack([lp["edge_emb2"] for lp in params["layers"]])   # (L, 3, D)
    eemb = e1[:, ea[:, 0], :] + e2[:, ea[:, 1], :]                 # (L, Etot, D)
    aeemb = jax.vmap(
        lambda e: jnp.zeros((N, emb_dim), jnp.float32).at[ei[1]].add(e))(eemb)

    bf16 = jnp.bfloat16
    # Per-layer weight slabs (bf16, lane-dense 128-wide channel dims).
    w1s = _pad_last2(jnp.stack([lp["w1"] for lp in params["layers"]]),
                     DP, HP).astype(bf16)
    w2s = _pad_last2(jnp.stack([lp["w2"] for lp in params["layers"]]),
                     HP, DP).astype(bf16)
    # Packed per-layer f32 slab: [b1; gamma; beta] (b2 dropped — BN cancels it).
    lbn = jnp.stack(
        [jnp.concatenate([_pad_last(lp["b1"], WP),
                          _pad_last(lp["gamma"], WP),
                          _pad_last(lp["beta"], WP)], axis=0)
         for lp in params["layers"]])                              # (L, 3, WP)

    # Head weights (bf16) and packed head-bias slab (f32).
    wf = _pad_last2(params["wf"], DP, FP).astype(bf16)
    wo1 = _pad_last2(params["wo1"], FP, FP).astype(bf16)
    wo2 = _pad_last2(params["wo2"], FP, OP).astype(bf16)
    hb = jnp.concatenate([_pad_last(params["bf"], FP),
                          _pad_last(params["bo1"], FP),
                          _pad_last(params["bo2"], FP)], axis=0)   # (3, FP)

    # global_mean_pool as a (G, N) pooling matrix (kept f32 for exact means).
    onehot = jax.nn.one_hot(batch, num_graphs, dtype=jnp.float32).T
    counts = jnp.maximum(jnp.sum(onehot, axis=1, keepdims=True), 1.0)
    P = onehot / counts

    h0p = _pad_last(h0, DP)
    aeembp = _pad_last(aeemb, DP).astype(bf16)
    adjb = adj.astype(bf16)

    operands = (h0p, adjb, aeembp, w1s, w2s, lbn, P, wf, wo1, wo2, hb)

    def _nbytes(a):
        return a.size * a.dtype.itemsize

    out_bytes = num_graphs * (FP + OP) * 4
    in_bytes = sum(_nbytes(a) for a in operands)
    # Gridless call: operands/outputs resident once; generous headroom, capped
    # below v7x physical VMEM.
    vmem_limit = int(min(max(2 * (in_bytes + out_bytes) + (4 << 20), 16 << 20),
                         64 << 20))

    flops = (2 * num_layer * (N * N * DP + N * DP * HP + N * HP * DP)
             + 2 * (num_graphs * N * DP + num_graphs * DP * FP
                    + num_graphs * FP * FP + num_graphs * FP * OP))
    cost = pl.CostEstimate(flops=flops,
                           transcendentals=num_layer * DP,
                           bytes_accessed=in_bytes + out_bytes)

    kern = functools.partial(fused_ginet_kernel, num_layer=num_layer,
                             hp=HP, dp=DP, op=OP)
    feat_p, out_p = pl.pallas_call(
        kern,
        out_shape=(jax.ShapeDtypeStruct((num_graphs, FP), jnp.float32),
                   jax.ShapeDtypeStruct((num_graphs, OP), jnp.float32)),
        in_specs=[_vmem()] * len(operands),
        out_specs=(_vmem(), _vmem()),
        compiler_params=pltpu.CompilerParams(vmem_limit_bytes=vmem_limit),
        cost_estimate=cost,
    )(*operands)

    # Slice padded lane dims back to logical widths.
    return feat_p[:, :feat_dim], out_p[:, :feat_dim // 2]


# ---------------------------------------------------------------------------
if __name__ == "__main__":
    num_layer = 3
    emb_dim = 32
    feat_dim = 32
    N = 16            # nodes
    G = 2             # graphs
    per_g = N // G

    key = jax.random.PRNGKey(0)
    kx1, kx2, kparams = jax.random.split(key, 3)

    # Synthetic molecular-graph inputs.
    x_nodes = jnp.stack(
        [jax.random.randint(kx1, (N,), 0, NUM_ATOM_TYPE),
         jax.random.randint(kx2, (N,), 0, NUM_CHIRALITY_TAG)], axis=1
    ).astype(jnp.int32)                                   # (N, 2)

    edges, attrs = [], []
    for g in range(G):
        base = g * per_g
        for i in range(per_g):                            # ring per graph, both dirs
            s, d = base + i, base + (i + 1) % per_g
            edges.append((s, d)); attrs.append((i % 4, i % 3))
            edges.append((d, s)); attrs.append((i % 4, (i + 1) % 3))
    edge_index = jnp.array(edges, dtype=jnp.int32).T      # (2, E) = (2, 32)
    edge_attr = jnp.array(attrs, dtype=jnp.int32)         # (E, 2)
    batch = jnp.repeat(jnp.arange(G, dtype=jnp.int32), per_g)   # (N,)
    # group_attr is accepted by the reference forward but never read by
    # message()/update(); it has no effect on the output.
    group_attr = jnp.zeros((N, emb_dim), jnp.float32)

    params = make_params(kparams, num_layer, emb_dim, feat_dim)

    h_feat, out = ginet_forward(params, x_nodes, edge_index, edge_attr, batch,
                                num_graphs=G, num_layer=num_layer,
                                emb_dim=emb_dim, feat_dim=feat_dim)
    jax.block_until_ready((h_feat, out))

    assert h_feat.shape == (G, feat_dim)
    assert out.shape == (G, feat_dim // 2)
    assert jnp.all(jnp.isfinite(h_feat)) and jnp.all(jnp.isfinite(out))
    print("KERNEL_OK")
</pallas_src>

<mosaic_0001>
module attributes {stable_mosaic.version = 11 : i64} {
  func.func @fused_ginet_kernel(%arg0: memref<16x128xf32, #tpu.memory_space<vmem>>, %arg1: memref<16x16xbf16, #tpu.memory_space<vmem>>, %arg2: memref<3x16x128xbf16, #tpu.memory_space<vmem>>, %arg3: memref<3x128x128xbf16, #tpu.memory_space<vmem>>, %arg4: memref<3x128x128xbf16, #tpu.memory_space<vmem>>, %arg5: memref<3x3x128xf32, #tpu.memory_space<vmem>>, %arg6: memref<2x16xf32, #tpu.memory_space<vmem>>, %arg7: memref<128x128xbf16, #tpu.memory_space<vmem>>, %arg8: memref<128x128xbf16, #tpu.memory_space<vmem>>, %arg9: memref<128x128xbf16, #tpu.memory_space<vmem>>, %arg10: memref<3x128xf32, #tpu.memory_space<vmem>>, %arg11: memref<2x128xf32, #tpu.memory_space<vmem>>, %arg12: memref<2x128xf32, #tpu.memory_space<vmem>>) attributes {dimension_semantics = [], scalar_prefetch = 0 : i64, scratch_operands = 0 : i64, tpu.core_type = #tpu.core_type<tc>} {
    %c0 = arith.constant 0 : index
    %c0_0 = arith.constant 0 : index
    %0 = vector.load %arg0[%c0, %c0_0] : memref<16x128xf32, #tpu.memory_space<vmem>>, vector<16x128xf32>
    %c0_1 = arith.constant 0 : index
    %c0_2 = arith.constant 0 : index
    %1 = vector.load %arg1[%c0_1, %c0_2] : memref<16x16xbf16, #tpu.memory_space<vmem>>, vector<16x16xbf16>
    %2 = arith.truncf %0 : vector<16x128xf32> to vector<16x128xbf16>
    %cst = arith.constant dense<0.000000e+00> : vector<16x128xf32>
    %3 = tpu.matmul %1, %2, %cst {dimension_numbers = #tpu.dot_dimension_numbers<[1], [0], [0], [1], [0, 0, 1, 1], [], []>} : vector<16x16xbf16>, vector<16x128xbf16>, vector<16x128xf32> -> vector<16x128xf32>
    %c0_3 = arith.constant 0 : index
    %c0_4 = arith.constant 0 : index
    %c0_5 = arith.constant 0 : index
    %4 = vector.load %arg2[%c0_3, %c0_4, %c0_5] : memref<3x16x128xbf16, #tpu.memory_space<vmem>>, vector<1x16x128xbf16>
    %5 = vector.shape_cast %4 : vector<1x16x128xbf16> to vector<16x128xbf16>
    %6 = arith.extf %5 : vector<16x128xbf16> to vector<16x128xf32>
    %7 = arith.addf %3, %6 : vector<16x128xf32>
    %c0_6 = arith.constant 0 : index
    %c0_7 = arith.constant 0 : index
    %c0_8 = arith.constant 0 : index
    %8 = vector.load %arg5[%c0_6, %c0_7, %c0_8] : memref<3x3x128xf32, #tpu.memory_space<vmem>>, vector<1x3x128xf32>
    %9 = vector.shape_cast %8 : vector<1x3x128xf32> to vector<3x128xf32>
    %10 = arith.truncf %7 : vector<16x128xf32> to vector<16x128xbf16>
    %c0_9 = arith.constant 0 : index
    %c0_10 = arith.constant 0 : index
    %c0_11 = arith.constant 0 : index
    %11 = vector.load %arg3[%c0_9, %c0_10, %c0_11] : memref<3x128x128xbf16, #tpu.memory_space<vmem>>, vector<1x128x128xbf16>
    %12 = vector.shape_cast %11 : vector<1x128x128xbf16> to vector<128x128xbf16>
    %cst_12 = arith.constant dense<0.000000e+00> : vector<16x128xf32>
    %13 = tpu.matmul %10, %12, %cst_12 {dimension_numbers = #tpu.dot_dimension_numbers<[1], [0], [0], [1], [0, 0, 1, 1], [], []>} : vector<16x128xbf16>, vector<128x128xbf16>, vector<16x128xf32> -> vector<16x128xf32>
    %14 = vector.extract_strided_slice %9 {offsets = [0, 0], sizes = [1, 128], strides = [1, 1]} : vector<3x128xf32> to vector<1x128xf32>
    %15 = vector.broadcast %14 : vector<1x128xf32> to vector<16x128xf32>
    %16 = arith.addf %13, %15 : vector<16x128xf32>
    %cst_13 = arith.constant 0.000000e+00 : f32
    %17 = vector.broadcast %cst_13 : f32 to vector<16x128xf32>
    %18 = arith.maximumf %16, %17 : vector<16x128xf32>
    %19 = arith.truncf %18 : vector<16x128xf32> to vector<16x128xbf16>
    %c0_14 = arith.constant 0 : index
    %c0_15 = arith.constant 0 : index
    %c0_16 = arith.constant 0 : index
    %20 = vector.load %arg4[%c0_14, %c0_15, %c0_16] : memref<3x128x128xbf16, #tpu.memory_space<vmem>>, vector<1x128x128xbf16>
    %21 = vector.shape_cast %20 : vector<1x128x128xbf16> to vector<128x128xbf16>
    %cst_17 = arith.constant dense<0.000000e+00> : vector<16x128xf32>
    %22 = tpu.matmul %19, %21, %cst_17 {dimension_numbers = #tpu.dot_dimension_numbers<[1], [0], [0], [1], [0, 0, 1, 1], [], []>} : vector<16x128xbf16>, vector<128x128xbf16>, vector<16x128xf32> -> vector<16x128xf32>
    %cst_18 = arith.constant dense<0.000000e+00> : vector<128xf32>
    %23 = vector.multi_reduction <add>, %22, %cst_18 [0] : vector<16x128xf32> to vector<128xf32>
    %24 = vector.shape_cast %23 : vector<128xf32> to vector<1x128xf32>
    %cst_19 = arith.constant 1.600000e+01 : f32
    %25 = vector.broadcast %cst_19 : f32 to vector<1x128xf32>
    %26 = arith.divf %24, %25 : vector<1x128xf32>
    %27 = arith.mulf %22, %22 : vector<16x128xf32>
    %cst_20 = arith.constant dense<0.000000e+00> : vector<128xf32>
    %28 = vector.multi_reduction <add>, %27, %cst_20 [0] : vector<16x128xf32> to vector<128xf32>
    %29 = vector.shape_cast %28 : vector<128xf32> to vector<1x128xf32>
    %cst_21 = arith.constant 1.600000e+01 : f32
    %30 = vector.broadcast %cst_21 : f32 to vector<1x128xf32>
    %31 = arith.divf %29, %30 : vector<1x128xf32>
    %32 = arith.mulf %26, %26 : vector<1x128xf32>
    %33 = arith.subf %31, %32 : vector<1x128xf32>
    %cst_22 = arith.constant 0.000000e+00 : f32
    %34 = vector.broadcast %cst_22 : f32 to vector<1x128xf32>
    %35 = arith.maximumf %33, %34 : vector<1x128xf32>
    %36 = vector.broadcast %26 : vector<1x128xf32> to vector<16x128xf32>
    %37 = arith.subf %22, %36 : vector<16x128xf32>
    %cst_23 = arith.constant 9.99999974E-6 : f32
    %38 = vector.broadcast %cst_23 : f32 to vector<1x128xf32>
    %39 = arith.addf %35, %38 : vector<1x128xf32>
    %40 = math.rsqrt %39 : vector<1x128xf32>
    %41 = vector.broadcast %40 : vector<1x128xf32> to vector<16x128xf32>
    %42 = arith.mulf %37, %41 : vector<16x128xf32>
    %43 = vector.extract_strided_slice %9 {offsets = [1, 0], sizes = [1, 128], strides = [1, 1]} : vector<3x128xf32> to vector<1x128xf32>
    %44 = vector.broadcast %43 : vector<1x128xf32> to vector<16x128xf32>
    %45 = arith.mulf %42, %44 : vector<16x128xf32>
    %46 = vector.extract_strided_slice %9 {offsets = [2, 0], sizes = [1, 128], strides = [1, 1]} : vector<3x128xf32> to vector<1x128xf32>
    %47 = vector.broadcast %46 : vector<1x128xf32> to vector<16x128xf32>
    %48 = arith.addf %45, %47 : vector<16x128xf32>
    %cst_24 = arith.constant 0.000000e+00 : f32
    %49 = vector.broadcast %cst_24 : f32 to vector<16x128xf32>
    %50 = arith.maximumf %48, %49 : vector<16x128xf32>
    %51 = arith.truncf %50 : vector<16x128xf32> to vector<16x128xbf16>
    %cst_25 = arith.constant dense<0.000000e+00> : vector<16x128xf32>
    %52 = tpu.matmul %1, %51, %cst_25 {dimension_numbers = #tpu.dot_dimension_numbers<[1], [0], [0], [1], [0, 0, 1, 1], [], []>} : vector<16x16xbf16>, vector<16x128xbf16>, vector<16x128xf32> -> vector<16x128xf32>
    %c1 = arith.constant 1 : index
    %c0_26 = arith.constant 0 : index
    %c0_27 = arith.constant 0 : index
    %53 = vector.load %arg2[%c1, %c0_26, %c0_27] : memref<3x16x128xbf16, #tpu.memory_space<vmem>>, vector<1x16x128xbf16>
    %54 = vector.shape_cast %53 : vector<1x16x128xbf16> to vector<16x128xbf16>
    %55 = arith.extf %54 : vector<16x128xbf16> to vector<16x128xf32>
    %56 = arith.addf %52, %55 : vector<16x128xf32>
    %c1_28 = arith.constant 1 : index
    %c0_29 = arith.constant 0 : index
    %c0_30 = arith.constant 0 : index
    %57 = vector.load %arg5[%c1_28, %c0_29, %c0_30] : memref<3x3x128xf32, #tpu.memory_space<vmem>>, vector<1x3x128xf32>
    %58 = vector.shape_cast %57 : vector<1x3x128xf32> to vector<3x128xf32>
    %59 = arith.truncf %56 : vector<16x128xf32> to vector<16x128xbf16>
    %c1_31 = arith.constant 1 : index
    %c0_32 = arith.constant 0 : index
    %c0_33 = arith.constant 0 : index
    %60 = vector.load %arg3[%c1_31, %c0_32, %c0_33] : memref<3x128x128xbf16, #tpu.memory_space<vmem>>, vector<1x128x128xbf16>
    %61 = vector.shape_cast %60 : vector<1x128x128xbf16> to vector<128x128xbf16>
    %cst_34 = arith.constant dense<0.000000e+00> : vector<16x128xf32>
    %62 = tpu.matmul %59, %61, %cst_34 {dimension_numbers = #tpu.dot_dimension_numbers<[1], [0], [0], [1], [0, 0, 1, 1], [], []>} : vector<16x128xbf16>, vector<128x128xbf16>, vector<16x128xf32> -> vector<16x128xf32>
    %63 = vector.extract_strided_slice %58 {offsets = [0, 0], sizes = [1, 128], strides = [1, 1]} : vector<3x128xf32> to vector<1x128xf32>
    %64 = vector.broadcast %63 : vector<1x128xf32> to vector<16x128xf32>
    %65 = arith.addf %62, %64 : vector<16x128xf32>
    %cst_35 = arith.constant 0.000000e+00 : f32
    %66 = vector.broadcast %cst_35 : f32 to vector<16x128xf32>
    %67 = arith.maximumf %65, %66 : vector<16x128xf32>
    %68 = arith.truncf %67 : vector<16x128xf32> to vector<16x128xbf16>
    %c1_36 = arith.constant 1 : index
    %c0_37 = arith.constant 0 : index
    %c0_38 = arith.constant 0 : index
    %69 = vector.load %arg4[%c1_36, %c0_37, %c0_38] : memref<3x128x128xbf16, #tpu.memory_space<vmem>>, vector<1x128x128xbf16>
    %70 = vector.shape_cast %69 : vector<1x128x128xbf16> to vector<128x128xbf16>
    %cst_39 = arith.constant dense<0.000000e+00> : vector<16x128xf32>
    %71 = tpu.matmul %68, %70, %cst_39 {dimension_numbers = #tpu.dot_dimension_numbers<[1], [0], [0], [1], [0, 0, 1, 1], [], []>} : vector<16x128xbf16>, vector<128x128xbf16>, vector<16x128xf32> -> vector<16x128xf32>
    %cst_40 = arith.constant dense<0.000000e+00> : vector<128xf32>
    %72 = vector.multi_reduction <add>, %71, %cst_40 [0] : vector<16x128xf32> to vector<128xf32>
    %73 = vector.shape_cast %72 : vector<128xf32> to vector<1x128xf32>
    %cst_41 = arith.constant 1.600000e+01 : f32
    %74 = vector.broadcast %cst_41 : f32 to vector<1x128xf32>
    %75 = arith.divf %73, %74 : vector<1x128xf32>
    %76 = arith.mulf %71, %71 : vector<16x128xf32>
    %cst_42 = arith.constant dense<0.000000e+00> : vector<128xf32>
    %77 = vector.multi_reduction <add>, %76, %cst_42 [0] : vector<16x128xf32> to vector<128xf32>
    %78 = vector.shape_cast %77 : vector<128xf32> to vector<1x128xf32>
    %cst_43 = arith.constant 1.600000e+01 : f32
    %79 = vector.broadcast %cst_43 : f32 to vector<1x128xf32>
    %80 = arith.divf %78, %79 : vector<1x128xf32>
    %81 = arith.mulf %75, %75 : vector<1x128xf32>
    %82 = arith.subf %80, %81 : vector<1x128xf32>
    %cst_44 = arith.constant 0.000000e+00 : f32
    %83 = vector.broadcast %cst_44 : f32 to vector<1x128xf32>
    %84 = arith.maximumf %82, %83 : vector<1x128xf32>
    %85 = vector.broadcast %75 : vector<1x128xf32> to vector<16x128xf32>
    %86 = arith.subf %71, %85 : vector<16x128xf32>
    %cst_45 = arith.constant 9.99999974E-6 : f32
    %87 = vector.broadcast %cst_45 : f32 to vector<1x128xf32>
    %88 = arith.addf %84, %87 : vector<1x128xf32>
    %89 = math.rsqrt %88 : vector<1x128xf32>
    %90 = vector.broadcast %89 : vector<1x128xf32> to vector<16x128xf32>
    %91 = arith.mulf %86, %90 : vector<16x128xf32>
    %92 = vector.extract_strided_slice %58 {offsets = [1, 0], sizes = [1, 128], strides = [1, 1]} : vector<3x128xf32> to vector<1x128xf32>
    %93 = vector.broadcast %92 : vector<1x128xf32> to vector<16x128xf32>
    %94 = arith.mulf %91, %93 : vector<16x128xf32>
    %95 = vector.extract_strided_slice %58 {offsets = [2, 0], sizes = [1, 128], strides = [1, 1]} : vector<3x128xf32> to vector<1x128xf32>
    %96 = vector.broadcast %95 : vector<1x128xf32> to vector<16x128xf32>
    %97 = arith.addf %94, %96 : vector<16x128xf32>
    %cst_46 = arith.constant 0.000000e+00 : f32
    %98 = vector.broadcast %cst_46 : f32 to vector<16x128xf32>
    %99 = arith.maximumf %97, %98 : vector<16x128xf32>
    %100 = arith.truncf %99 : vector<16x128xf32> to vector<16x128xbf16>
    %cst_47 = arith.constant dense<0.000000e+00> : vector<16x128xf32>
    %101 = tpu.matmul %1, %100, %cst_47 {dimension_numbers = #tpu.dot_dimension_numbers<[1], [0], [0], [1], [0, 0, 1, 1], [], []>} : vector<16x16xbf16>, vector<16x128xbf16>, vector<16x128xf32> -> vector<16x128xf32>
    %c2 = arith.constant 2 : index
    %c0_48 = arith.constant 0 : index
    %c0_49 = arith.constant 0 : index
    %102 = vector.load %arg2[%c2, %c0_48, %c0_49] : memref<3x16x128xbf16, #tpu.memory_space<vmem>>, vector<1x16x128xbf16>
    %103 = vector.shape_cast %102 : vector<1x16x128xbf16> to vector<16x128xbf16>
    %104 = arith.extf %103 : vector<16x128xbf16> to vector<16x128xf32>
    %105 = arith.addf %101, %104 : vector<16x128xf32>
    %c2_50 = arith.constant 2 : index
    %c0_51 = arith.constant 0 : index
    %c0_52 = arith.constant 0 : index
    %106 = vector.load %arg5[%c2_50, %c0_51, %c0_52] : memref<3x3x128xf32, #tpu.memory_space<vmem>>, vector<1x3x128xf32>
    %107 = vector.shape_cast %106 : vector<1x3x128xf32> to vector<3x128xf32>
    %108 = arith.truncf %105 : vector<16x128xf32> to vector<16x128xbf16>
    %c2_53 = arith.constant 2 : index
    %c0_54 = arith.constant 0 : index
    %c0_55 = arith.constant 0 : index
    %109 = vector.load %arg3[%c2_53, %c0_54, %c0_55] : memref<3x128x128xbf16, #tpu.memory_space<vmem>>, vector<1x128x128xbf16>
    %110 = vector.shape_cast %109 : vector<1x128x128xbf16> to vector<128x128xbf16>
    %cst_56 = arith.constant dense<0.000000e+00> : vector<16x128xf32>
    %111 = tpu.matmul %108, %110, %cst_56 {dimension_numbers = #tpu.dot_dimension_numbers<[1], [0], [0], [1], [0, 0, 1, 1], [], []>} : vector<16x128xbf16>, vector<128x128xbf16>, vector<16x128xf32> -> vector<16x128xf32>
    %112 = vector.extract_strided_slice %107 {offsets = [0, 0], sizes = [1, 128], strides = [1, 1]} : vector<3x128xf32> to vector<1x128xf32>
    %113 = vector.broadcast %112 : vector<1x128xf32> to vector<16x128xf32>
    %114 = arith.addf %111, %113 : vector<16x128xf32>
    %cst_57 = arith.constant 0.000000e+00 : f32
    %115 = vector.broadcast %cst_57 : f32 to vector<16x128xf32>
    %116 = arith.maximumf %114, %115 : vector<16x128xf32>
    %117 = arith.truncf %116 : vector<16x128xf32> to vector<16x128xbf16>
    %c2_58 = arith.constant 2 : index
    %c0_59 = arith.constant 0 : index
    %c0_60 = arith.constant 0 : index
    %118 = vector.load %arg4[%c2_58, %c0_59, %c0_60] : memref<3x128x128xbf16, #tpu.memory_space<vmem>>, vector<1x128x128xbf16>
    %119 = vector.shape_cast %118 : vector<1x128x128xbf16> to vector<128x128xbf16>
    %cst_61 = arith.constant dense<0.000000e+00> : vector<16x128xf32>
    %120 = tpu.matmul %117, %119, %cst_61 {dimension_numbers = #tpu.dot_dimension_numbers<[1], [0], [0], [1], [0, 0, 1, 1], [], []>} : vector<16x128xbf16>, vector<128x128xbf16>, vector<16x128xf32> -> vector<16x128xf32>
    %cst_62 = arith.constant dense<0.000000e+00> : vector<128xf32>
    %121 = vector.multi_reduction <add>, %120, %cst_62 [0] : vector<16x128xf32> to vector<128xf32>
    %122 = vector.shape_cast %121 : vector<128xf32> to vector<1x128xf32>
    %cst_63 = arith.constant 1.600000e+01 : f32
    %123 = vector.broadcast %cst_63 : f32 to vector<1x128xf32>
    %124 = arith.divf %122, %123 : vector<1x128xf32>
    %125 = arith.mulf %120, %120 : vector<16x128xf32>
    %cst_64 = arith.constant dense<0.000000e+00> : vector<128xf32>
    %126 = vector.multi_reduction <add>, %125, %cst_64 [0] : vector<16x128xf32> to vector<128xf32>
    %127 = vector.shape_cast %126 : vector<128xf32> to vector<1x128xf32>
    %cst_65 = arith.constant 1.600000e+01 : f32
    %128 = vector.broadcast %cst_65 : f32 to vector<1x128xf32>
    %129 = arith.divf %127, %128 : vector<1x128xf32>
    %130 = arith.mulf %124, %124 : vector<1x128xf32>
    %131 = arith.subf %129, %130 : vector<1x128xf32>
    %cst_66 = arith.constant 0.000000e+00 : f32
    %132 = vector.broadcast %cst_66 : f32 to vector<1x128xf32>
    %133 = arith.maximumf %131, %132 : vector<1x128xf32>
    %134 = vector.broadcast %124 : vector<1x128xf32> to vector<16x128xf32>
    %135 = arith.subf %120, %134 : vector<16x128xf32>
    %cst_67 = arith.constant 9.99999974E-6 : f32
    %136 = vector.broadcast %cst_67 : f32 to vector<1x128xf32>
    %137 = arith.addf %133, %136 : vector<1x128xf32>
    %138 = math.rsqrt %137 : vector<1x128xf32>
    %139 = vector.broadcast %138 : vector<1x128xf32> to vector<16x128xf32>
    %140 = arith.mulf %135, %139 : vector<16x128xf32>
    %141 = vector.extract_strided_slice %107 {offsets = [1, 0], sizes = [1, 128], strides = [1, 1]} : vector<3x128xf32> to vector<1x128xf32>
    %142 = vector.broadcast %141 : vector<1x128xf32> to vector<16x128xf32>
    %143 = arith.mulf %140, %142 : vector<16x128xf32>
    %144 = vector.extract_strided_slice %107 {offsets = [2, 0], sizes = [1, 128], strides = [1, 1]} : vector<3x128xf32> to vector<1x128xf32>
    %145 = vector.broadcast %144 : vector<1x128xf32> to vector<16x128xf32>
    %146 = arith.addf %143, %145 : vector<16x128xf32>
    %c0_68 = arith.constant 0 : index
    %c0_69 = arith.constant 0 : index
    %147 = vector.load %arg6[%c0_68, %c0_69] : memref<2x16xf32, #tpu.memory_space<vmem>>, vector<2x16xf32>
    %cst_70 = arith.constant dense<0.000000e+00> : vector<2x128xf32>
    %148 = tpu.matmul %147, %146, %cst_70 {dimension_numbers = #tpu.dot_dimension_numbers<[1], [0], [0], [1], [0, 0, 1, 1], [], []>} : vector<2x16xf32>, vector<16x128xf32>, vector<2x128xf32> -> vector<2x128xf32>
    %c0_71 = arith.constant 0 : index
    %c0_72 = arith.constant 0 : index
    %149 = vector.load %arg10[%c0_71, %c0_72] : memref<3x128xf32, #tpu.memory_space<vmem>>, vector<3x128xf32>
    %150 = arith.truncf %148 : vector<2x128xf32> to vector<2x128xbf16>
    %c0_73 = arith.constant 0 : index
    %c0_74 = arith.constant 0 : index
    %151 = vector.load %arg7[%c0_73, %c0_74] : memref<128x128xbf16, #tpu.memory_space<vmem>>, vector<128x128xbf16>
    %cst_75 = arith.constant dense<0.000000e+00> : vector<2x128xf32>
    %152 = tpu.matmul %150, %151, %cst_75 {dimension_numbers = #tpu.dot_dimension_numbers<[1], [0], [0], [1], [0, 0, 1, 1], [], []>} : vector<2x128xbf16>, vector<128x128xbf16>, vector<2x128xf32> -> vector<2x128xf32>
    %153 = vector.extract_strided_slice %149 {offsets = [0, 0], sizes = [1, 128], strides = [1, 1]} : vector<3x128xf32> to vector<1x128xf32>
    %154 = vector.broadcast %153 : vector<1x128xf32> to vector<2x128xf32>
    %155 = arith.addf %152, %154 : vector<2x128xf32>
    %c0_76 = arith.constant 0 : index
    %c0_77 = arith.constant 0 : index
    %156 = vector.load %arg11[%c0_76, %c0_77] : memref<2x128xf32, #tpu.memory_space<vmem>>, vector<2x128xf32>
    tpu.vector_store %arg11[%c0_76, %c0_77], %155 {strides = array<i32>} : memref<2x128xf32, #tpu.memory_space<vmem>>, vector<2x128xf32>,
    %157 = arith.truncf %155 : vector<2x128xf32> to vector<2x128xbf16>
    %c0_78 = arith.constant 0 : index
    %c0_79 = arith.constant 0 : index
    %158 = vector.load %arg8[%c0_78, %c0_79] : memref<128x128xbf16, #tpu.memory_space<vmem>>, vector<128x128xbf16>
    %cst_80 = arith.constant dense<0.000000e+00> : vector<2x128xf32>
    %159 = tpu.matmul %157, %158, %cst_80 {dimension_numbers = #tpu.dot_dimension_numbers<[1], [0], [0], [1], [0, 0, 1, 1], [], []>} : vector<2x128xbf16>, vector<128x128xbf16>, vector<2x128xf32> -> vector<2x128xf32>
    %160 = vector.extract_strided_slice %149 {offsets = [1, 0], sizes = [1, 128], strides = [1, 1]} : vector<3x128xf32> to vector<1x128xf32>
    %161 = vector.broadcast %160 : vector<1x128xf32> to vector<2x128xf32>
    %162 = arith.addf %159, %161 : vector<2x128xf32>
    %cst_81 = arith.constant 0.000000e+00 : f32
    %163 = vector.broadcast %cst_81 : f32 to vector<2x128xf32>
    %164 = arith.maximumf %162, %163 : vector<2x128xf32>
    %165 = arith.truncf %164 : vector<2x128xf32> to vector<2x128xbf16>
    %c0_82 = arith.constant 0 : index
    %c0_83 = arith.constant 0 : index
    %166 = vector.load %arg9[%c0_82, %c0_83] : memref<128x128xbf16, #tpu.memory_space<vmem>>, vector<128x128xbf16>
    %cst_84 = arith.constant dense<0.000000e+00> : vector<2x128xf32>
    %167 = tpu.matmul %165, %166, %cst_84 {dimension_numbers = #tpu.dot_dimension_numbers<[1], [0], [0], [1], [0, 0, 1, 1], [], []>} : vector<2x128xbf16>, vector<128x128xbf16>, vector<2x128xf32> -> vector<2x128xf32>
    %168 = vector.extract_strided_slice %149 {offsets = [2, 0], sizes = [1, 128], strides = [1, 1]} : vector<3x128xf32> to vector<1x128xf32>
    %169 = vector.broadcast %168 : vector<1x128xf32> to vector<2x128xf32>
    %170 = arith.addf %167, %169 : vector<2x128xf32>
    %c0_85 = arith.constant 0 : index
    %c0_86 = arith.constant 0 : index
    %171 = vector.load %arg12[%c0_85, %c0_86] : memref<2x128xf32, #tpu.memory_space<vmem>>, vector<2x128xf32>
    tpu.vector_store %arg12[%c0_85, %c0_86], %170 {strides = array<i32>} : memref<2x128xf32, #tpu.memory_space<vmem>>, vector<2x128xf32>,
    return
  }
}

</mosaic_0001>

<llo_original>
// kernel: tpu_custom_call.1
$region0: #{tpu_custom_call.1}
  #allocation0 [shape = 'u32[]', space=smem, size = 0x4, offset = 0x4, fixed_abs, tag = 'smem constant byte address 0x4 - core index']
  #allocation1 [shape = 'u32[144,128]{1,0:T(1,128)}', space=vmem, size = 0x12000, scoped, tag = 'internal scratch']
  %s0 = inlined_call_operand.hbm [shape: f32[16,128], index: 0, kind: input, shape index: {}]
  %s1 = inlined_call_operand.hbm [shape: bf16[16,16], index: 1, kind: input, shape index: {}]
  %s2 = inlined_call_operand.hbm [shape: bf16[3,16,128], index: 2, kind: input, shape index: {}]
  %s3 = inlined_call_operand.hbm [shape: bf16[3,128,128], index: 3, kind: input, shape index: {}]
  %s4 = inlined_call_operand.hbm [shape: bf16[3,128,128], index: 4, kind: input, shape index: {}]
  %s5 = inlined_call_operand.hbm [shape: f32[3,3,128], index: 5, kind: input, shape index: {}]
  %s6 = inlined_call_operand.vmem [shape: f32[2,16], index: 6, kind: input, shape index: {}]
  %s7 = inlined_call_operand.hbm [shape: bf16[128,128], index: 7, kind: input, shape index: {}]
  %s8 = inlined_call_operand.hbm [shape: bf16[128,128], index: 8, kind: input, shape index: {}]
  %s9 = inlined_call_operand.hbm [shape: bf16[128,128], index: 9, kind: input, shape index: {}]
  %s10 = inlined_call_operand.vmem [shape: f32[3,128], index: 10, kind: input, shape index: {}]
  %s11 = inlined_call_operand.hbm [shape: f32[2,128], index: 11, kind: output, shape index: {0}]
  %s12 = inlined_call_operand.hbm [shape: f32[2,128], index: 12, kind: output, shape index: {1}]
  %13 = xla_tuple %s11, %s12
  %s14 = sld [smem:[#allocation0]]
  $region98: #{tpu_custom_call.1} parent=0
    _
  %s16 = ssub.s32 1, %s14
  %s17 = scalar_select 0, %s16, %s14
  $region1: #{tpu_custom_call.1} parent=0
    #allocation2 [shape = 'u8[8192]{0}', space=vmem, size = 0x2000, scoped, tag = 'input window, operand 0, single buffered']
    #allocation3 [shape = 's32[1]{0}', space=sflag, size = 0x4, scoped, tag = 'scoped memory for tpu_custom_call.1']
    #allocation4 [shape = 's32[1]{0}', space=sflag, size = 0x4, scoped, tag = 'scoped memory for tpu_custom_call.1']
    #allocation5 [shape = 'u8[4096]{0}', space=vmem, size = 0x1000, scoped, tag = 'input window, operand 1, single buffered']
    #allocation6 [shape = 's32[1]{0}', space=sflag, size = 0x4, scoped, tag = 'scoped memory for tpu_custom_call.1']
    #allocation7 [shape = 'u8[12288]{0}', space=vmem, size = 0x3000, scoped, tag = 'input window, operand 2, single buffered']
    #allocation8 [shape = 'u8[98304]{0}', space=vmem, size = 0x18000, scoped, tag = 'input window, operand 3, single buffered']
    #allocation9 [shape = 's32[1]{0}', space=sflag, size = 0x4, scoped, tag = 'scoped memory for tpu_custom_call.1']
    #allocation10 [shape = 'u8[98304]{0}', space=vmem, size = 0x18000, scoped, tag = 'input window, operand 4, single buffered']
    #allocation11 [shape = 'u8[6144]{0}', space=vmem, size = 0x1800, scoped, tag = 'input window, operand 5, single buffered']
    #allocation12 [shape = 's32[1]{0}', space=sflag, size = 0x4, scoped, tag = 'scoped memory for tpu_custom_call.1']
    #allocation13 [shape = 'u8[32768]{0}', space=vmem, size = 0x8000, scoped, tag = 'input window, operand 7, single buffered']
    #allocation14 [shape = 'u8[32768]{0}', space=vmem, size = 0x8000, scoped, tag = 'input window, operand 8, single buffered']
    #allocation15 [shape = 's32[1]{0}', space=sflag, size = 0x4, scoped, tag = 'scoped memory for tpu_custom_call.1']
    #allocation16 [shape = 'u8[32768]{0}', space=vmem, size = 0x8000, scoped, tag = 'input window, operand 9, single buffered']
    #allocation17 [shape = 'u8[1024]{0}', space=vmem, size = 0x400, scoped, tag = 'output window, operand 0, single buffered']
    #allocation18 [shape = 'u8[1024]{0}', space=vmem, size = 0x400, scoped, tag = 'output window, operand 1, single buffered']
    #allocation19 [shape = 's32[1]{0}', space=sflag, size = 0x4, scoped, tag = 'scoped memory for tpu_custom_call.1']
    %18 = vsyncpa [#allocation3], 0
    %19 = vsyncpa [#allocation6], 0
    %20 = vsyncpa [#allocation9], 0
    %21 = vsyncpa [#allocation12], 0
    %22 = vsyncpa [#allocation15], 0
    %23 = vsyncpa [#allocation4], 0
    %24 = vsyncpa [#allocation19], 0
    // Predicated region
    $region2: #{tpu_custom_call.1} parent=1 // pred_check
      _
    $region3: #{tpu_custom_call.1} parent=1 // pred_check_branch
      %26 = sbr.rel (0) target = $region5
    $region4: #{tpu_custom_call.1} parent=1 // pred_region
      %s28 = ssub.s32 256, 256
      %29 = vsyncadd [#allocation3], %s28
      %s30 = sshll.u32 [#allocation2], 4
      %s31 = int_to_ptr.vmem [resolvable:$true] %s30
      %36 = dma.hbm_to_vmem [thread:$0]  %s0, 256, %s31, [#allocation3], 128, 128, 8
    $region5: #{tpu_custom_call.1} parent=1 // pred_fallthru
      _
    // Predicated region
    $region6: #{tpu_custom_call.1} parent=1 // pred_check
      _
    $region7: #{tpu_custom_call.1} parent=1 // pred_check_branch
      %38 = sbr.rel (0) target = $region9
    $region8: #{tpu_custom_call.1} parent=1 // pred_region
      %s40 = ssub.s32 128, 128
      %41 = vsyncadd [#allocation6], %s40
      %s42 = sshll.u32 [#allocation5], 4
      %s43 = int_to_ptr.vmem [resolvable:$true] %s42
      %48 = dma.hbm_to_vmem [thread:$0]  %s1, 128, %s43, [#allocation6], 64, 64, 4
    $region9: #{tpu_custom_call.1} parent=1 // pred_fallthru
      _
    // Predicated region
    $region10: #{tpu_custom_call.1} parent=1 // pred_check
      _
    $region11: #{tpu_custom_call.1} parent=1 // pred_check_branch
      %50 = sbr.rel (0) target = $region13
    $region12: #{tpu_custom_call.1} parent=1 // pred_region
      %s52 = ssub.s32 384, 384
      %53 = vsyncadd [#allocation6], %s52
      %s54 = sshll.u32 [#allocation7], 4
      %s55 = int_to_ptr.vmem [resolvable:$true] %s54
      %60 = dma.hbm_to_vmem [thread:$0]  %s2, 384, %s55, [#allocation6], 64, 64, 4
    $region13: #{tpu_custom_call.1} parent=1 // pred_fallthru
      _
    // Predicated region
    $region14: #{tpu_custom_call.1} parent=1 // pred_check
      _
    $region15: #{tpu_custom_call.1} parent=1 // pred_check_branch
      %62 = sbr.rel (0) target = $region17
    $region16: #{tpu_custom_call.1} parent=1 // pred_region
      %s64 = ssub.s32 3072, 3072
      %65 = vsyncadd [#allocation9], %s64
      %s66 = sshll.u32 [#allocation8], 4
      %s67 = int_to_ptr.vmem [resolvable:$true] %s66
      %72 = dma.hbm_to_vmem [thread:$0]  %s3, 3072, %s67, [#allocation9], 64, 64, 4
    $region17: #{tpu_custom_call.1} parent=1 // pred_fallthru
      _
    // Predicated region
    $region18: #{tpu_custom_call.1} parent=1 // pred_check
      _
    $region19: #{tpu_custom_call.1} parent=1 // pred_check_branch
      %74 = sbr.rel (0) target = $region21
    $region20: #{tpu_custom_call.1} parent=1 // pred_region
      %s76 = ssub.s32 3072, 3072
      %77 = vsyncadd [#allocation9], %s76
      %s78 = sshll.u32 [#allocation10], 4
      %s79 = int_to_ptr.vmem [resolvable:$true] %s78
      %84 = dma.hbm_to_vmem [thread:$0]  %s4, 3072, %s79, [#allocation9], 64, 64, 4
    $region21: #{tpu_custom_call.1} parent=1 // pred_fallthru
      _
    // Predicated region
    $region22: #{tpu_custom_call.1} parent=1 // pred_check
      _
    $region23: #{tpu_custom_call.1} parent=1 // pred_check_branch
      %86 = sbr.rel (0) target = $region25
    $region24: #{tpu_custom_call.1} parent=1 // pred_region
      %s88 = ssub.s32 192, 192
      %89 = vsyncadd [#allocation12], %s88
      %s90 = sshll.u32 [#allocation11], 4
      %s91 = int_to_ptr.vmem [resolvable:$true] %s90
      %96 = dma.hbm_to_vmem [thread:$0]  %s5, 192, %s91, [#allocation12], 64, 64, 4
    $region25: #{tpu_custom_call.1} parent=1 // pred_fallthru
      _
    // Predicated region
    $region26: #{tpu_custom_call.1} parent=1 // pred_check
      _
    $region27: #{tpu_custom_call.1} parent=1 // pred_check_branch
      %98 = sbr.rel (0) target = $region29
    $region28: #{tpu_custom_call.1} parent=1 // pred_region
      _
    $region29: #{tpu_custom_call.1} parent=1 // pred_fallthru
      _
    // Predicated region
    $region30: #{tpu_custom_call.1} parent=1 // pred_check
      _
    $region31: #{tpu_custom_call.1} parent=1 // pred_check_branch
      %100 = sbr.rel (0) target = $region33
    $region32: #{tpu_custom_call.1} parent=1 // pred_region
      %s102 = ssub.s32 1024, 1024
      %103 = vsyncadd [#allocation12], %s102
      %s104 = sshll.u32 [#allocation13], 4
      %s105 = int_to_ptr.vmem [resolvable:$true] %s104
      %110 = dma.hbm_to_vmem [thread:$0]  %s7, 1024, %s105, [#allocation12], 64, 64, 4
    $region33: #{tpu_custom_call.1} parent=1 // pred_fallthru
      _
    // Predicated region
    $region34: #{tpu_custom_call.1} parent=1 // pred_check
      _
    $region35: #{tpu_custom_call.1} parent=1 // pred_check_branch
      %112 = sbr.rel (0) target = $region37
    $region36: #{tpu_custom_call.1} parent=1 // pred_region
      %s114 = ssub.s32 1024, 1024
      %115 = vsyncadd [#allocation15], %s114
      %s116 = sshll.u32 [#allocation14], 4
      %s117 = int_to_ptr.vmem [resolvable:$true] %s116
      %122 = dma.hbm_to_vmem [thread:$0]  %s8, 1024, %s117, [#allocation15], 64, 64, 4
    $region37: #{tpu_custom_call.1} parent=1 // pred_fallthru
      _
    // Predicated region
    $region38: #{tpu_custom_call.1} parent=1 // pred_check
      _
    $region39: #{tpu_custom_call.1} parent=1 // pred_check_branch
      %124 = sbr.rel (0) target = $region41
    $region40: #{tpu_custom_call.1} parent=1 // pred_region
      %s126 = ssub.s32 1024, 1024
      %127 = vsyncadd [#allocation15], %s126
      %s128 = sshll.u32 [#allocation16], 4
      %s129 = int_to_ptr.vmem [resolvable:$true] %s128
      %134 = dma.hbm_to_vmem [thread:$0]  %s9, 1024, %s129, [#allocation15], 64, 64, 4
    $region41: #{tpu_custom_call.1} parent=1 // pred_fallthru
      _
    // Predicated region
    $region42: #{tpu_custom_call.1} parent=1 // pred_check
      _
    $region43: #{tpu_custom_call.1} parent=1 // pred_check_branch
      %136 = sbr.rel (0) target = $region45
    $region44: #{tpu_custom_call.1} parent=1 // pred_region
      _
    $region45: #{tpu_custom_call.1} parent=1 // pred_fallthru
      _
    // Predicated region
    $region46: #{tpu_custom_call.1} parent=1 // pred_check
      _
    $region47: #{tpu_custom_call.1} parent=1 // pred_check_branch
      %138 = sbr.rel (0) target = $region49
    $region48: #{tpu_custom_call.1} parent=1 // pred_region
      %139 = dma.done [#allocation3], 256
    $region49: #{tpu_custom_call.1} parent=1 // pred_fallthru
      _
    // Predicated region
    $region50: #{tpu_custom_call.1} parent=1 // pred_check
      _
    $region51: #{tpu_custom_call.1} parent=1 // pred_check_branch
      %141 = sbr.rel (0) target = $region53
    $region52: #{tpu_custom_call.1} parent=1 // pred_region
      %142 = dma.done [#allocation6], 128
    $region53: #{tpu_custom_call.1} parent=1 // pred_fallthru
      _
    // Predicated region
    $region54: #{tpu_custom_call.1} parent=1 // pred_check
      _
    $region55: #{tpu_custom_call.1} parent=1 // pred_check_branch
      %144 = sbr.rel (0) target = $region57
    $region56: #{tpu_custom_call.1} parent=1 // pred_region
      %145 = dma.done [#allocation6], 384
    $region57: #{tpu_custom_call.1} parent=1 // pred_fallthru
      _
    // Predicated region
    $region58: #{tpu_custom_call.1} parent=1 // pred_check
      _
    $region59: #{tpu_custom_call.1} parent=1 // pred_check_branch
      %147 = sbr.rel (0) target = $region61
    $region60: #{tpu_custom_call.1} parent=1 // pred_region
      %148 = dma.done [#allocation9], 3072
    $region61: #{tpu_custom_call.1} parent=1 // pred_fallthru
      _
    // Predicated region
    $region62: #{tpu_custom_call.1} parent=1 // pred_check
      _
    $region63: #{tpu_custom_call.1} parent=1 // pred_check_branch
      %150 = sbr.rel (0) target = $region65
    $region64: #{tpu_custom_call.1} parent=1 // pred_region
      %151 = dma.done [#allocation9], 3072
    $region65: #{tpu_custom_call.1} parent=1 // pred_fallthru
      _
    // Predicated region
    $region66: #{tpu_custom_call.1} parent=1 // pred_check
      _
    $region67: #{tpu_custom_call.1} parent=1 // pred_check_branch
      %153 = sbr.rel (0) target = $region69
    $region68: #{tpu_custom_call.1} parent=1 // pred_region
      %154 = dma.done [#allocation12], 192
    $region69: #{tpu_custom_call.1} parent=1 // pred_fallthru
      _
    // Predicated region
    $region70: #{tpu_custom_call.1} parent=1 // pred_check
      _
    $region71: #{tpu_custom_call.1} parent=1 // pred_check_branch
      %156 = sbr.rel (0) target = $region73
    $region72: #{tpu_custom_call.1} parent=1 // pred_region
      %157 = dma.done [#allocation12], 1024
    $region73: #{tpu_custom_call.1} parent=1 // pred_fallthru
      _
    // Predicated region
    $region74: #{tpu_custom_call.1} parent=1 // pred_check
      _
    $region75: #{tpu_custom_call.1} parent=1 // pred_check_branch
      %159 = sbr.rel (0) target = $region77
    $region76: #{tpu_custom_call.1} parent=1 // pred_region
      %160 = dma.done [#allocation15], 1024
    $region77: #{tpu_custom_call.1} parent=1 // pred_fallthru
      _
    // Predicated region
    $region78: #{tpu_custom_call.1} parent=1 // pred_check
      _
    $region79: #{tpu_custom_call.1} parent=1 // pred_check_branch
      %162 = sbr.rel (0) target = $region81
    $region80: #{tpu_custom_call.1} parent=1 // pred_region
      %163 = dma.done [#allocation15], 1024
    $region81: #{tpu_custom_call.1} parent=1 // pred_fallthru
      _
    %v165 = vld [vmem:[#allocation2] sm:$0xff]
    %v166 = vld [vmem:[#allocation2 + $0x8] sm:$0xff]
    %v167 = vld [vmem:[#allocation5] sm:$0xf]
    %v168 = vld [vmem:[#allocation5 + $0x4] sm:$0xf]
    %v169 = vpack.c.bf16 %v166, %v165
    %v170 = vld [vmem:[#allocation7] sm:$0xf]
    %v171 = vld [vmem:[#allocation7 + $0x4] sm:$0xf]
    %v172 = vunpack.c.l.bf16 %v170
    %v173 = vunpack.c.l.bf16 %v171
    %v176 = vunpack.c.l.b16 %v167
    %v177 = vunpack.c.l.b16 %v168
    %v178 = vpack.c.b16 %v177, %v176
    %vm179 = vcmask 130048
    %v181 = vsel %vm179, %v178, 0
    %183 = vmatprep.subr.bf16.mxu0 0
    %184 = vmatpush1.bf16.msra.mxu0 0
    %185 = vmatprep.subr.bf16.mxu0 0
    %186 = vmatpush1.bf16.msra.mxu0 0
    %187 = vmatprep.subr.bf16.mxu0 0
    %188 = vmatpush1.bf16.msra.mxu0 0
    %189 = vmatprep.subr.bf16.mxu0 0
    %190 = vmatpush1.bf16.msra.mxu0 0
    %191 = vmatprep.subr.bf16.mxu0 0
    %192 = vmatpush1.bf16.msra.mxu0 0
    %193 = vmatprep.subr.bf16.mxu0 0
    %194 = vmatpush1.bf16.msra.mxu0 0
    %195 = vmatprep.subr.bf16.mxu0 0
    %196 = vmatpush1.bf16.msra.mxu0 0
    %197 = vmatprep.subr.bf16.mxu0 0
    %198 = vmatpush1.bf16.msra.mxu0 %v169
    %199 = vmatprep.subr.bf16.mxu0 0
    %200 = vmatpush2.bf16.msra.mxu0 0
    %201 = vmatprep.subr.bf16.mxu0 0
    %202 = vmatpush2.bf16.msra.mxu0 0
    %203 = vmatprep.subr.bf16.mxu0 0
    %204 = vmatpush2.bf16.msra.mxu0 0
    %205 = vmatprep.subr.bf16.mxu0 0
    %206 = vmatpush2.bf16.msra.mxu0 0
    %207 = vmatprep.subr.bf16.mxu0 0
    %208 = vmatpush2.bf16.msra.mxu0 0
    %209 = vmatprep.subr.bf16.mxu0 0
    %210 = vmatpush2.bf16.msra.mxu0 0
    %211 = vmatprep.subr.bf16.mxu0 0
    %212 = vmatpush2.bf16.msra.mxu0 0
    %213 = vmatprep.subr.bf16.mxu0 0
    %214 = vmatpush2.bf16.msra.mxu0 0
    %215 = vmatprep.mubr.bf16.mxu0 0
    %216 = vmatmul.mubr.bf16.gmra.mxu0 %v181
    %v217 = vpop.f32.mrf.mxu0
    %v218 = vadd.f32 %v172, %v217
    %v219 = vpop.f32.mrf.mxu0
    %v220 = vpop.f32.mrf.mxu0
    %v221 = vadd.f32 %v173, %v220
    %v222 = vpop.f32.mrf.mxu0
    %223 = vdwg.mxu0
    %v224 = vld [vmem:[#allocation11] sm:$0x7]
    %v225 = vpack.c.bf16 %v221, %v218
    %v226 = vld [vmem:[#allocation8] sm:$0xf]
    %v227 = vld [vmem:[#allocation8 + $0x4] sm:$0xf]
    %v228 = vld [vmem:[#allocation8 + $0x8] sm:$0xf]
    %v229 = vld [vmem:[#allocation8 + $0xc] sm:$0xf]
    %v230 = vld [vmem:[#allocation8 + $0x10] sm:$0xf]
    %v231 = vld [vmem:[#allocation8 + $0x14] sm:$0xf]
    %v232 = vld [vmem:[#allocation8 + $0x18] sm:$0xf]
    %v233 = vld [vmem:[#allocation8 + $0x1c] sm:$0xf]
    %v234 = vld [vmem:[#allocation8 + $0x20] sm:$0xf]
    %v235 = vld [vmem:[#allocation8 + $0x24] sm:$0xf]
    %v236 = vld [vmem:[#allocation8 + $0x28] sm:$0xf]
    %v237 = vld [vmem:[#allocation8 + $0x2c] sm:$0xf]
    %v238 = vld [vmem:[#allocation8 + $0x30] sm:$0xf]
    %v239 = vld [vmem:[#allocation8 + $0x34] sm:$0xf]
    %v240 = vld [vmem:[#allocation8 + $0x38] sm:$0xf]
    %v241 = vld [vmem:[#allocation8 + $0x3c] sm:$0xf]
    %v242 = vlaneseq
    %v243 = vshrl.u32 %v242, 7
    %v244 = vsub.s32 0, %v243
    %v245 = vrot.slane %v224, %v244
    %v262 = vunpack.c.l.b16 %v226
    %v263 = vunpack.c.l.b16 %v227
    %v264 = vunpack.c.l.b16 %v228
    %v265 = vunpack.c.l.b16 %v229
    %v266 = vunpack.c.l.b16 %v230
    %v267 = vunpack.c.l.b16 %v231
    %v268 = vunpack.c.l.b16 %v232
    %v269 = vunpack.c.l.b16 %v233
    %v270 = vunpack.c.l.b16 %v234
    %v271 = vunpack.c.l.b16 %v235
    %v272 = vunpack.c.l.b16 %v236
    %v273 = vunpack.c.l.b16 %v237
    %v274 = vunpack.c.l.b16 %v238
    %v275 = vunpack.c.l.b16 %v239
    %v276 = vunpack.c.l.b16 %v240
    %v277 = vunpack.c.l.b16 %v241
    %v278 = vpack.c.b16 %v263, %v262
    %v279 = vpack.c.b16 %v265, %v264
    %v280 = vpack.c.b16 %v267, %v266
    %v281 = vpack.c.b16 %v269, %v268
    %v282 = vpack.c.b16 %v271, %v270
    %v283 = vpack.c.b16 %v273, %v272
    %v284 = vpack.c.b16 %v275, %v274
    %v285 = vpack.c.b16 %v277, %v276
    %294 = vmatprep.subr.bf16.mxu0 0
    %295 = vmatpush1.bf16.msra.mxu0 %v285
    %296 = vmatprep.subr.bf16.mxu0 0
    %297 = vmatpush1.bf16.msra.mxu0 %v284
    %298 = vmatprep.subr.bf16.mxu0 0
    %299 = vmatpush1.bf16.msra.mxu0 %v283
    %300 = vmatprep.subr.bf16.mxu0 0
    %301 = vmatpush1.bf16.msra.mxu0 %v282
    %302 = vmatprep.subr.bf16.mxu0 0
    %303 = vmatpush1.bf16.msra.mxu0 %v281
    %304 = vmatprep.subr.bf16.mxu0 0
    %305 = vmatpush1.bf16.msra.mxu0 %v280
    %306 = vmatprep.subr.bf16.mxu0 0
    %307 = vmatpush1.bf16.msra.mxu0 %v279
    %308 = vmatprep.subr.bf16.mxu0 0
    %309 = vmatpush1.bf16.msra.mxu0 %v278
    %310 = vmatprep.subr.bf16.mxu0 0
    %311 = vmatpush2.bf16.msra.mxu0 0
    %312 = vmatprep.subr.bf16.mxu0 0
    %313 = vmatpush2.bf16.msra.mxu0 0
    %314 = vmatprep.subr.bf16.mxu0 0
    %315 = vmatpush2.bf16.msra.mxu0 0
    %316 = vmatprep.subr.bf16.mxu0 0
    %317 = vmatpush2.bf16.msra.mxu0 0
    %318 = vmatprep.subr.bf16.mxu0 0
    %319 = vmatpush2.bf16.msra.mxu0 0
    %320 = vmatprep.subr.bf16.mxu0 0
    %321 = vmatpush2.bf16.msra.mxu0 0
    %322 = vmatprep.subr.bf16.mxu0 0
    %323 = vmatpush2.bf16.msra.mxu0 0
    %324 = vmatprep.subr.bf16.mxu0 0
    %325 = vmatpush2.bf16.msra.mxu0 0
    %326 = vmatprep.mubr.bf16.mxu0 0
    %327 = vmatmul.mubr.bf16.gmra.mxu0 %v225
    %v328 = vpop.f32.mrf.mxu0
    %v329 = vadd.f32 %v245, %v328
    %v330 = vpop.f32.mrf.mxu0
    %v331 = vpop.f32.mrf.mxu0
    %v332 = vadd.f32 %v245, %v331
    %v333 = vpop.f32.mrf.mxu0
    %334 = vdwg.mxu0
    %v335 = vmax.f32 %v329, 0.0
    %v336 = vmax.f32 %v332, 0.0
    %v337 = vpack.c.bf16 %v336, %v335
    %v338 = vld [vmem:[#allocation10] sm:$0xf]
    %v339 = vld [vmem:[#allocation10 + $0x4] sm:$0xf]
    %v340 = vld [vmem:[#allocation10 + $0x8] sm:$0xf]
    %v341 = vld [vmem:[#allocation10 + $0xc] sm:$0xf]
    %v342 = vld [vmem:[#allocation10 + $0x10] sm:$0xf]
    %v343 = vld [vmem:[#allocation10 + $0x14] sm:$0xf]
    %v344 = vld [vmem:[#allocation10 + $0x18] sm:$0xf]
    %v345 = vld [vmem:[#allocation10 + $0x1c] sm:$0xf]
    %v346 = vld [vmem:[#allocation10 + $0x20] sm:$0xf]
    %v347 = vld [vmem:[#allocation10 + $0x24] sm:$0xf]
    %v348 = vld [vmem:[#allocation10 + $0x28] sm:$0xf]
    %v349 = vld [vmem:[#allocation10 + $0x2c] sm:$0xf]
    %v350 = vld [vmem:[#allocation10 + $0x30] sm:$0xf]
    %v351 = vld [vmem:[#allocation10 + $0x34] sm:$0xf]
    %v352 = vld [vmem:[#allocation10 + $0x38] sm:$0xf]
    %v353 = vld [vmem:[#allocation10 + $0x3c] sm:$0xf]
    %v370 = vunpack.c.l.b16 %v338
    %v371 = vunpack.c.l.b16 %v339
    %v372 = vunpack.c.l.b16 %v340
    %v373 = vunpack.c.l.b16 %v341
    %v374 = vunpack.c.l.b16 %v342
    %v375 = vunpack.c.l.b16 %v343
    %v376 = vunpack.c.l.b16 %v344
    %v377 = vunpack.c.l.b16 %v345
    %v378 = vunpack.c.l.b16 %v346
    %v379 = vunpack.c.l.b16 %v347
    %v380 = vunpack.c.l.b16 %v348
    %v381 = vunpack.c.l.b16 %v349
    %v382 = vunpack.c.l.b16 %v350
    %v383 = vunpack.c.l.b16 %v351
    %v384 = vunpack.c.l.b16 %v352
    %v385 = vunpack.c.l.b16 %v353
    %v386 = vpack.c.b16 %v371, %v370
    %v387 = vpack.c.b16 %v373, %v372
    %v388 = vpack.c.b16 %v375, %v374
    %v389 = vpack.c.b16 %v377, %v376
    %v390 = vpack.c.b16 %v379, %v378
    %v391 = vpack.c.b16 %v381, %v380
    %v392 = vpack.c.b16 %v383, %v382
    %v393 = vpack.c.b16 %v385, %v384
    %402 = vmatprep.subr.bf16.mxu0 0
    %403 = vmatpush1.bf16.msra.mxu0 %v393
    %404 = vmatprep.subr.bf16.mxu0 0
    %405 = vmatpush1.bf16.msra.mxu0 %v392
    %406 = vmatprep.subr.bf16.mxu0 0
    %407 = vmatpush1.bf16.msra.mxu0 %v391
    %408 = vmatprep.subr.bf16.mxu0 0
    %409 = vmatpush1.bf16.msra.mxu0 %v390
    %410 = vmatprep.subr.bf16.mxu0 0
    %411 = vmatpush1.bf16.msra.mxu0 %v389
    %412 = vmatprep.subr.bf16.mxu0 0
    %413 = vmatpush1.bf16.msra.mxu0 %v388
    %414 = vmatprep.subr.bf16.mxu0 0
    %415 = vmatpush1.bf16.msra.mxu0 %v387
    %416 = vmatprep.subr.bf16.mxu0 0
    %417 = vmatpush1.bf16.msra.mxu0 %v386
    %418 = vmatprep.subr.bf16.mxu0 0
    %419 = vmatpush2.bf16.msra.mxu0 0
    %420 = vmatprep.subr.bf16.mxu0 0
    %421 = vmatpush2.bf16.msra.mxu0 0
    %422 = vmatprep.subr.bf16.mxu0 0
    %423 = vmatpush2.bf16.msra.mxu0 0
    %424 = vmatprep.subr.bf16.mxu0 0
    %425 = vmatpush2.bf16.msra.mxu0 0
    %426 = vmatprep.subr.bf16.mxu0 0
    %427 = vmatpush2.bf16.msra.mxu0 0
    %428 = vmatprep.subr.bf16.mxu0 0
    %429 = vmatpush2.bf16.msra.mxu0 0
    %430 = vmatprep.subr.bf16.mxu0 0
    %431 = vmatpush2.bf16.msra.mxu0 0
    %432 = vmatprep.subr.bf16.mxu0 0
    %433 = vmatpush2.bf16.msra.mxu0 0
    %434 = vmatprep.mubr.bf16.mxu0 0
    %435 = vmatmul.mubr.bf16.gmra.mxu0 %v337
    %v436 = vpop.f32.mrf.mxu0
    %v437 = vadd.f32 0.0, %v436
    %v438 = vpop.f32.mrf.mxu0
    %v439 = vpop.f32.mrf.mxu0
    %v440 = vadd.f32 0.0, %v439
    %v441 = vpop.f32.mrf.mxu0
    %442 = vdwg.mxu0
    %v443 = vadd.f32 %v437, %v440
    %v444 = vrot.slane %v443, 4
    %v445 = vadd.f32 %v443, %v444
    %v446 = vrot.slane %v445, 2
    %v447 = vadd.f32 %v445, %v446
    %v448 = vrot.slane %v447, 1
    %v449 = vadd.f32 %v447, %v448
    %v450 = vrcp.pop 16.0
    %v451 = vmul.f32 %v449, %v450
    %v452 = vmul.f32 %v437, %v437
    %v453 = vmul.f32 %v440, %v440
    %v454 = vadd.f32 %v452, %v453
    %v455 = vrot.slane %v454, 4
    %v456 = vadd.f32 %v454, %v455
    %v457 = vrot.slane %v456, 2
    %v458 = vadd.f32 %v456, %v457
    %v459 = vrot.slane %v458, 1
    %v460 = vadd.f32 %v458, %v459
    %v461 = vmul.f32 %v460, %v450
    %v462 = vmul.f32 %v451, %v451
    %v463 = vsub.f32 %v461, %v462
    %v464 = vmax.f32 %v463, 0.0
    %v465 = vsub.f32 %v437, %v451
    %v466 = vsub.f32 %v440, %v451
    %v467 = vadd.f32 %v464, 1e-05
    %v468 = vrsqrt.pop %v467
    %v469 = vmul.f32 %v465, %v468
    %v470 = vmul.f32 %v466, %v468
    %v471 = vlaneseq
    %v472 = vshrl.u32 %v471, 7
    %v473 = vsub.s32 1, %v472
    %v474 = vrot.slane %v224, %v473
    %v475 = vmul.f32 %v469, %v474
    %v476 = vmul.f32 %v470, %v474
    %v477 = vlaneseq
    %v478 = vshrl.u32 %v477, 7
    %v479 = vsub.s32 2, %v478
    %v480 = vrot.slane %v224, %v479
    %v481 = vadd.f32 %v475, %v480
    %v482 = vadd.f32 %v476, %v480
    %v483 = vmax.f32 %v481, 0.0
    %v484 = vmax.f32 %v482, 0.0
    %v485 = vpack.c.bf16 %v484, %v483
    %s486 = scalar_lea.vmem [#allocation7], 8
    %v487 = vld [vmem:[%s486] sm:$0xf]
    %v488 = vld [vmem:[%s486 + $0x4] sm:$0xf]
    %v489 = vunpack.c.l.bf16 %v487
    %v490 = vunpack.c.l.bf16 %v488
    %491 = vmatprep.subr.bf16.mxu0 0
    %492 = vmatpush1.bf16.msra.mxu0 0
    %493 = vmatprep.subr.bf16.mxu0 0
    %494 = vmatpush1.bf16.msra.mxu0 0
    %495 = vmatprep.subr.bf16.mxu0 0
    %496 = vmatpush1.bf16.msra.mxu0 0
    %497 = vmatprep.subr.bf16.mxu0 0
    %498 = vmatpush1.bf16.msra.mxu0 0
    %499 = vmatprep.subr.bf16.mxu0 0
    %500 = vmatpush1.bf16.msra.mxu0 0
    %501 = vmatprep.subr.bf16.mxu0 0
    %502 = vmatpush1.bf16.msra.mxu0 0
    %503 = vmatprep.subr.bf16.mxu0 0
    %504 = vmatpush1.bf16.msra.mxu0 0
    %505 = vmatprep.subr.bf16.mxu0 0
    %506 = vmatpush1.bf16.msra.mxu0 %v485
    %507 = vmatprep.subr.bf16.mxu0 0
    %508 = vmatpush2.bf16.msra.mxu0 0
    %509 = vmatprep.subr.bf16.mxu0 0
    %510 = vmatpush2.bf16.msra.mxu0 0
    %511 = vmatprep.subr.bf16.mxu0 0
    %512 = vmatpush2.bf16.msra.mxu0 0
    %513 = vmatprep.subr.bf16.mxu0 0
    %514 = vmatpush2.bf16.msra.mxu0 0
    %515 = vmatprep.subr.bf16.mxu0 0
    %516 = vmatpush2.bf16.msra.mxu0 0
    %517 = vmatprep.subr.bf16.mxu0 0
    %518 = vmatpush2.bf16.msra.mxu0 0
    %519 = vmatprep.subr.bf16.mxu0 0
    %520 = vmatpush2.bf16.msra.mxu0 0
    %521 = vmatprep.subr.bf16.mxu0 0
    %522 = vmatpush2.bf16.msra.mxu0 0
    %523 = vmatprep.mubr.bf16.mxu0 0
    %524 = vmatmul.mubr.bf16.gmra.mxu0 %v181
    %v525 = vpop.f32.mrf.mxu0
    %v526 = vadd.f32 %v489, %v525
    %v527 = vpop.f32.mrf.mxu0
    %v528 = vpop.f32.mrf.mxu0
    %v529 = vadd.f32 %v490, %v528
    %v530 = vpop.f32.mrf.mxu0
    %531 = vdwg.mxu0
    %s532 = scalar_lea.vmem [#allocation11], 4
    %v533 = vld [vmem:[%s532] sm:$0x7]
    %v534 = vpack.c.bf16 %v529, %v526
    %s535 = scalar_lea.vmem [#allocation8], 64
    %v536 = vld [vmem:[%s535] sm:$0xf]
    %v537 = vld [vmem:[%s535 + $0x4] sm:$0xf]
    %v538 = vld [vmem:[%s535 + $0x8] sm:$0xf]
    %v539 = vld [vmem:[%s535 + $0xc] sm:$0xf]
    %v540 = vld [vmem:[%s535 + $0x10] sm:$0xf]
    %v541 = vld [vmem:[%s535 + $0x14] sm:$0xf]
    %v542 = vld [vmem:[%s535 + $0x18] sm:$0xf]
    %v543 = vld [vmem:[%s535 + $0x1c] sm:$0xf]
    %v544 = vld [vmem:[%s535 + $0x20] sm:$0xf]
    %v545 = vld [vmem:[%s535 + $0x24] sm:$0xf]
    %v546 = vld [vmem:[%s535 + $0x28] sm:$0xf]
    %v547 = vld [vmem:[%s535 + $0x2c] sm:$0xf]
    %v548 = vld [vmem:[%s535 + $0x30] sm:$0xf]
    %v549 = vld [vmem:[%s535 + $0x34] sm:$0xf]
    %v550 = vld [vmem:[%s535 + $0x38] sm:$0xf]
    %v551 = vld [vmem:[%s535 + $0x3c] sm:$0xf]
    %v552 = vlaneseq
    %v553 = vshrl.u32 %v552, 7
    %v554 = vsub.s32 0, %v553
    %v555 = vrot.slane %v533, %v554
    %v572 = vunpack.c.l.b16 %v536
    %v573 = vunpack.c.l.b16 %v537
    %v574 = vunpack.c.l.b16 %v538
    %v575 = vunpack.c.l.b16 %v539
    %v576 = vunpack.c.l.b16 %v540
    %v577 = vunpack.c.l.b16 %v541
    %v578 = vunpack.c.l.b16 %v542
    %v579 = vunpack.c.l.b16 %v543
    %v580 = vunpack.c.l.b16 %v544
    %v581 = vunpack.c.l.b16 %v545
    %v582 = vunpack.c.l.b16 %v546
    %v583 = vunpack.c.l.b16 %v547
    %v584 = vunpack.c.l.b16 %v548
    %v585 = vunpack.c.l.b16 %v549
    %v586 = vunpack.c.l.b16 %v550
    %v587 = vunpack.c.l.b16 %v551
    %v588 = vpack.c.b16 %v573, %v572
    %v589 = vpack.c.b16 %v575, %v574
    %v590 = vpack.c.b16 %v577, %v576
    %v591 = vpack.c.b16 %v579, %v578
    %v592 = vpack.c.b16 %v581, %v580
    %v593 = vpack.c.b16 %v583, %v582
    %v594 = vpack.c.b16 %v585, %v584
    %v595 = vpack.c.b16 %v587, %v586
    %604 = vmatprep.subr.bf16.mxu0 0
    %605 = vmatpush1.bf16.msra.mxu0 %v595
    %606 = vmatprep.subr.bf16.mxu0 0
    %607 = vmatpush1.bf16.msra.mxu0 %v594
    %608 = vmatprep.subr.bf16.mxu0 0
    %609 = vmatpush1.bf16.msra.mxu0 %v593
    %610 = vmatprep.subr.bf16.mxu0 0
    %611 = vmatpush1.bf16.msra.mxu0 %v592
    %612 = vmatprep.subr.bf16.mxu0 0
    %613 = vmatpush1.bf16.msra.mxu0 %v591
    %614 = vmatprep.subr.bf16.mxu0 0
    %615 = vmatpush1.bf16.msra.mxu0 %v590
    %616 = vmatprep.subr.bf16.mxu0 0
    %617 = vmatpush1.bf16.msra.mxu0 %v589
    %618 = vmatprep.subr.bf16.mxu0 0
    %619 = vmatpush1.bf16.msra.mxu0 %v588
    %620 = vmatprep.subr.bf16.mxu0 0
    %621 = vmatpush2.bf16.msra.mxu0 0
    %622 = vmatprep.subr.bf16.mxu0 0
    %623 = vmatpush2.bf16.msra.mxu0 0
    %624 = vmatprep.subr.bf16.mxu0 0
    %625 = vmatpush2.bf16.msra.mxu0 0
    %626 = vmatprep.subr.bf16.mxu0 0
    %627 = vmatpush2.bf16.msra.mxu0 0
    %628 = vmatprep.subr.bf16.mxu0 0
    %629 = vmatpush2.bf16.msra.mxu0 0
    %630 = vmatprep.subr.bf16.mxu0 0
    %631 = vmatpush2.bf16.msra.mxu0 0
    %632 = vmatprep.subr.bf16.mxu0 0
    %633 = vmatpush2.bf16.msra.mxu0 0
    %634 = vmatprep.subr.bf16.mxu0 0
    %635 = vmatpush2.bf16.msra.mxu0 0
    %636 = vmatprep.mubr.bf16.mxu0 0
    %637 = vmatmul.mubr.bf16.gmra.mxu0 %v534
    %v638 = vpop.f32.mrf.mxu0
    %v639 = vadd.f32 %v555, %v638
    %v640 = vpop.f32.mrf.mxu0
    %v641 = vpop.f32.mrf.mxu0
    %v642 = vadd.f32 %v555, %v641
    %v643 = vpop.f32.mrf.mxu0
    %644 = vdwg.mxu0
    %v645 = vmax.f32 %v639, 0.0
    %v646 = vmax.f32 %v642, 0.0
    %v647 = vpack.c.bf16 %v646, %v645
    %s648 = scalar_lea.vmem [#allocation10], 64
    %v649 = vld [vmem:[%s648] sm:$0xf]
    %v650 = vld [vmem:[%s648 + $0x4] sm:$0xf]
    %v651 = vld [vmem:[%s648 + $0x8] sm:$0xf]
    %v652 = vld [vmem:[%s648 + $0xc] sm:$0xf]
    %v653 = vld [vmem:[%s648 + $0x10] sm:$0xf]
    %v654 = vld [vmem:[%s648 + $0x14] sm:$0xf]
    %v655 = vld [vmem:[%s648 + $0x18] sm:$0xf]
    %v656 = vld [vmem:[%s648 + $0x1c] sm:$0xf]
    %v657 = vld [vmem:[%s648 + $0x20] sm:$0xf]
    %v658 = vld [vmem:[%s648 + $0x24] sm:$0xf]
    %v659 = vld [vmem:[%s648 + $0x28] sm:$0xf]
    %v660 = vld [vmem:[%s648 + $0x2c] sm:$0xf]
    %v661 = vld [vmem:[%s648 + $0x30] sm:$0xf]
    %v662 = vld [vmem:[%s648 + $0x34] sm:$0xf]
    %v663 = vld [vmem:[%s648 + $0x38] sm:$0xf]
    %v664 = vld [vmem:[%s648 + $0x3c] sm:$0xf]
    %v681 = vunpack.c.l.b16 %v649
    %v682 = vunpack.c.l.b16 %v650
    %v683 = vunpack.c.l.b16 %v651
    %v684 = vunpack.c.l.b16 %v652
    %v685 = vunpack.c.l.b16 %v653
    %v686 = vunpack.c.l.b16 %v654
    %v687 = vunpack.c.l.b16 %v655
    %v688 = vunpack.c.l.b16 %v656
    %v689 = vunpack.c.l.b16 %v657
    %v690 = vunpack.c.l.b16 %v658
    %v691 = vunpack.c.l.b16 %v659
    %v692 = vunpack.c.l.b16 %v660
    %v693 = vunpack.c.l.b16 %v661
    %v694 = vunpack.c.l.b16 %v662
    %v695 = vunpack.c.l.b16 %v663
    %v696 = vunpack.c.l.b16 %v664
    %v697 = vpack.c.b16 %v682, %v681
    %v698 = vpack.c.b16 %v684, %v683
    %v699 = vpack.c.b16 %v686, %v685
    %v700 = vpack.c.b16 %v688, %v687
    %v701 = vpack.c.b16 %v690, %v689
    %v702 = vpack.c.b16 %v692, %v691
    %v703 = vpack.c.b16 %v694, %v693
    %v704 = vpack.c.b16 %v696, %v695
    %713 = vmatprep.subr.bf16.mxu0 0
    %714 = vmatpush1.bf16.msra.mxu0 %v704
    %715 = vmatprep.subr.bf16.mxu0 0
    %716 = vmatpush1.bf16.msra.mxu0 %v703
    %717 = vmatprep.subr.bf16.mxu0 0
    %718 = vmatpush1.bf16.msra.mxu0 %v702
    %719 = vmatprep.subr.bf16.mxu0 0
    %720 = vmatpush1.bf16.msra.mxu0 %v701
    %721 = vmatprep.subr.bf16.mxu0 0
    %722 = vmatpush1.bf16.msra.mxu0 %v700
    %723 = vmatprep.subr.bf16.mxu0 0
    %724 = vmatpush1.bf16.msra.mxu0 %v699
    %725 = vmatprep.subr.bf16.mxu0 0
    %726 = vmatpush1.bf16.msra.mxu0 %v698
    %727 = vmatprep.subr.bf16.mxu0 0
    %728 = vmatpush1.bf16.msra.mxu0 %v697
    %729 = vmatprep.subr.bf16.mxu0 0
    %730 = vmatpush2.bf16.msra.mxu0 0
    %731 = vmatprep.subr.bf16.mxu0 0
    %732 = vmatpush2.bf16.msra.mxu0 0
    %733 = vmatprep.subr.bf16.mxu0 0
    %734 = vmatpush2.bf16.msra.mxu0 0
    %735 = vmatprep.subr.bf16.mxu0 0
    %736 = vmatpush2.bf16.msra.mxu0 0
    %737 = vmatprep.subr.bf16.mxu0 0
    %738 = vmatpush2.bf16.msra.mxu0 0
    %739 = vmatprep.subr.bf16.mxu0 0
    %740 = vmatpush2.bf16.msra.mxu0 0
    %741 = vmatprep.subr.bf16.mxu0 0
    %742 = vmatpush2.bf16.msra.mxu0 0
    %743 = vmatprep.subr.bf16.mxu0 0
    %744 = vmatpush2.bf16.msra.mxu0 0
    %745 = vmatprep.mubr.bf16.mxu0 0
    %746 = vmatmul.mubr.bf16.gmra.mxu0 %v647
    %v747 = vpop.f32.mrf.mxu0
    %v748 = vadd.f32 0.0, %v747
    %v749 = vpop.f32.mrf.mxu0
    %v750 = vpop.f32.mrf.mxu0
    %v751 = vadd.f32 0.0, %v750
    %v752 = vpop.f32.mrf.mxu0
    %753 = vdwg.mxu0
    %v754 = vadd.f32 %v748, %v751
    %v755 = vrot.slane %v754, 4
    %v756 = vadd.f32 %v754, %v755
    %v757 = vrot.slane %v756, 2
    %v758 = vadd.f32 %v756, %v757
    %v759 = vrot.slane %v758, 1
    %v760 = vadd.f32 %v758, %v759
    %v761 = vmul.f32 %v760, %v450
    %v762 = vmul.f32 %v748, %v748
    %v763 = vmul.f32 %v751, %v751
    %v764 = vadd.f32 %v762, %v763
    %v765 = vrot.slane %v764, 4
    %v766 = vadd.f32 %v764, %v765
    %v767 = vrot.slane %v766, 2
    %v768 = vadd.f32 %v766, %v767
    %v769 = vrot.slane %v768, 1
    %v770 = vadd.f32 %v768, %v769
    %v771 = vmul.f32 %v770, %v450
    %v772 = vmul.f32 %v761, %v761
    %v773 = vsub.f32 %v771, %v772
    %v774 = vmax.f32 %v773, 0.0
    %v775 = vsub.f32 %v748, %v761
    %v776 = vsub.f32 %v751, %v761
    %v777 = vadd.f32 %v774, 1e-05
    %v778 = vrsqrt.pop %v777
    %v779 = vmul.f32 %v775, %v778
    %v780 = vmul.f32 %v776, %v778
    %v781 = vlaneseq
    %v782 = vshrl.u32 %v781, 7
    %v783 = vsub.s32 1, %v782
    %v784 = vrot.slane %v533, %v783
    %v785 = vmul.f32 %v779, %v784
    %v786 = vmul.f32 %v780, %v784
    %v787 = vlaneseq
    %v788 = vshrl.u32 %v787, 7
    %v789 = vsub.s32 2, %v788
    %v790 = vrot.slane %v533, %v789
    %v791 = vadd.f32 %v785, %v790
    %v792 = vadd.f32 %v786, %v790
    %v793 = vmax.f32 %v791, 0.0
    %v794 = vmax.f32 %v792, 0.0
    %v795 = vpack.c.bf16 %v794, %v793
    %s796 = scalar_lea.vmem [#allocation7], 16
    %v797 = vld [vmem:[%s796] sm:$0xf]
    %v798 = vld [vmem:[%s796 + $0x4] sm:$0xf]
    %v799 = vunpack.c.l.bf16 %v797
    %v800 = vunpack.c.l.bf16 %v798
    %801 = vmatprep.subr.bf16.mxu0 0
    %802 = vmatpush1.bf16.msra.mxu0 0
    %803 = vmatprep.subr.bf16.mxu0 0
    %804 = vmatpush1.bf16.msra.mxu0 0
    %805 = vmatprep.subr.bf16.mxu0 0
    %806 = vmatpush1.bf16.msra.mxu0 0
    %807 = vmatprep.subr.bf16.mxu0 0
    %808 = vmatpush1.bf16.msra.mxu0 0
    %809 = vmatprep.subr.bf16.mxu0 0
    %810 = vmatpush1.bf16.msra.mxu0 0
    %811 = vmatprep.subr.bf16.mxu0 0
    %812 = vmatpush1.bf16.msra.mxu0 0
    %813 = vmatprep.subr.bf16.mxu0 0
    %814 = vmatpush1.bf16.msra.mxu0 0
    %815 = vmatprep.subr.bf16.mxu0 0
    %816 = vmatpush1.bf16.msra.mxu0 %v795
    %817 = vmatprep.subr.bf16.mxu0 0
    %818 = vmatpush2.bf16.msra.mxu0 0
    %819 = vmatprep.subr.bf16.mxu0 0
    %820 = vmatpush2.bf16.msra.mxu0 0
    %821 = vmatprep.subr.bf16.mxu0 0
    %822 = vmatpush2.bf16.msra.mxu0 0
    %823 = vmatprep.subr.bf16.mxu0 0
    %824 = vmatpush2.bf16.msra.mxu0 0
    %825 = vmatprep.subr.bf16.mxu0 0
    %826 = vmatpush2.bf16.msra.mxu0 0
    %827 = vmatprep.subr.bf16.mxu0 0
    %828 = vmatpush2.bf16.msra.mxu0 0
    %829 = vmatprep.subr.bf16.mxu0 0
    %830 = vmatpush2.bf16.msra.mxu0 0
    %831 = vmatprep.subr.bf16.mxu0 0
    %832 = vmatpush2.bf16.msra.mxu0 0
    %833 = vmatprep.mubr.bf16.mxu0 0
    %834 = vmatmul.mubr.bf16.gmra.mxu0 %v181
    %v835 = vpop.f32.mrf.mxu0
    %v836 = vadd.f32 %v799, %v835
    %v837 = vpop.f32.mrf.mxu0
    %v838 = vpop.f32.mrf.mxu0
    %v839 = vadd.f32 %v800, %v838
    %v840 = vpop.f32.mrf.mxu0
    %841 = vdwg.mxu0
    %s842 = scalar_lea.vmem [#allocation11], 8
    %v843 = vld [vmem:[%s842] sm:$0x7]
    %v844 = vpack.c.bf16 %v839, %v836
    %s845 = scalar_lea.vmem [#allocation8], 128
    %v846 = vld [vmem:[%s845] sm:$0xf]
    %v847 = vld [vmem:[%s845 + $0x4] sm:$0xf]
    %v848 = vld [vmem:[%s845 + $0x8] sm:$0xf]
    %v849 = vld [vmem:[%s845 + $0xc] sm:$0xf]
    %v850 = vld [vmem:[%s845 + $0x10] sm:$0xf]
    %v851 = vld [vmem:[%s845 + $0x14] sm:$0xf]
    %v852 = vld [vmem:[%s845 + $0x18] sm:$0xf]
    %v853 = vld [vmem:[%s845 + $0x1c] sm:$0xf]
    %v854 = vld [vmem:[%s845 + $0x20] sm:$0xf]
    %v855 = vld [vmem:[%s845 + $0x24] sm:$0xf]
    %v856 = vld [vmem:[%s845 + $0x28] sm:$0xf]
    %v857 = vld [vmem:[%s845 + $0x2c] sm:$0xf]
    %v858 = vld [vmem:[%s845 + $0x30] sm:$0xf]
    %v859 = vld [vmem:[%s845 + $0x34] sm:$0xf]
    %v860 = vld [vmem:[%s845 + $0x38] sm:$0xf]
    %v861 = vld [vmem:[%s845 + $0x3c] sm:$0xf]
    %v862 = vlaneseq
    %v863 = vshrl.u32 %v862, 7
    %v864 = vsub.s32 0, %v863
    %v865 = vrot.slane %v843, %v864
    %v882 = vunpack.c.l.b16 %v846
    %v883 = vunpack.c.l.b16 %v847
    %v884 = vunpack.c.l.b16 %v848
    %v885 = vunpack.c.l.b16 %v849
    %v886 = vunpack.c.l.b16 %v850
    %v887 = vunpack.c.l.b16 %v851
    %v888 = vunpack.c.l.b16 %v852
    %v889 = vunpack.c.l.b16 %v853
    %v890 = vunpack.c.l.b16 %v854
    %v891 = vunpack.c.l.b16 %v855
    %v892 = vunpack.c.l.b16 %v856
    %v893 = vunpack.c.l.b16 %v857
    %v894 = vunpack.c.l.b16 %v858
    %v895 = vunpack.c.l.b16 %v859
    %v896 = vunpack.c.l.b16 %v860
    %v897 = vunpack.c.l.b16 %v861
    %v898 = vpack.c.b16 %v883, %v882
    %v899 = vpack.c.b16 %v885, %v884
    %v900 = vpack.c.b16 %v887, %v886
    %v901 = vpack.c.b16 %v889, %v888
    %v902 = vpack.c.b16 %v891, %v890
    %v903 = vpack.c.b16 %v893, %v892
    %v904 = vpack.c.b16 %v895, %v894
    %v905 = vpack.c.b16 %v897, %v896
    %914 = vmatprep.subr.bf16.mxu0 0
    %915 = vmatpush1.bf16.msra.mxu0 %v905
    %916 = vmatprep.subr.bf16.mxu0 0
    %917 = vmatpush1.bf16.msra.mxu0 %v904
    %918 = vmatprep.subr.bf16.mxu0 0
    %919 = vmatpush1.bf16.msra.mxu0 %v903
    %920 = vmatprep.subr.bf16.mxu0 0
    %921 = vmatpush1.bf16.msra.mxu0 %v902
    %922 = vmatprep.subr.bf16.mxu0 0
    %923 = vmatpush1.bf16.msra.mxu0 %v901
    %924 = vmatprep.subr.bf16.mxu0 0
    %925 = vmatpush1.bf16.msra.mxu0 %v900
    %926 = vmatprep.subr.bf16.mxu0 0
    %927 = vmatpush1.bf16.msra.mxu0 %v899
    %928 = vmatprep.subr.bf16.mxu0 0
    %929 = vmatpush1.bf16.msra.mxu0 %v898
    %930 = vmatprep.subr.bf16.mxu0 0
    %931 = vmatpush2.bf16.msra.mxu0 0
    %932 = vmatprep.subr.bf16.mxu0 0
    %933 = vmatpush2.bf16.msra.mxu0 0
    %934 = vmatprep.subr.bf16.mxu0 0
    %935 = vmatpush2.bf16.msra.mxu0 0
    %936 = vmatprep.subr.bf16.mxu0 0
    %937 = vmatpush2.bf16.msra.mxu0 0
    %938 = vmatprep.subr.bf16.mxu0 0
    %939 = vmatpush2.bf16.msra.mxu0 0
    %940 = vmatprep.subr.bf16.mxu0 0
    %941 = vmatpush2.bf16.msra.mxu0 0
    %942 = vmatprep.subr.bf16.mxu0 0
    %943 = vmatpush2.bf16.msra.mxu0 0
    %944 = vmatprep.subr.bf16.mxu0 0
    %945 = vmatpush2.bf16.msra.mxu0 0
    %946 = vmatprep.mubr.bf16.mxu0 0
    %947 = vmatmul.mubr.bf16.gmra.mxu0 %v844
    %v948 = vpop.f32.mrf.mxu0
    %v949 = vadd.f32 %v865, %v948
    %v950 = vpop.f32.mrf.mxu0
    %v951 = vpop.f32.mrf.mxu0
    %v952 = vadd.f32 %v865, %v951
    %v953 = vpop.f32.mrf.mxu0
    %954 = vdwg.mxu0
    %v955 = vmax.f32 %v949, 0.0
    %v956 = vmax.f32 %v952, 0.0
    %v957 = vpack.c.bf16 %v956, %v955
    %s958 = scalar_lea.vmem [#allocation10], 128
    %v959 = vld [vmem:[%s958] sm:$0xf]
    %v960 = vld [vmem:[%s958 + $0x4] sm:$0xf]
    %v961 = vld [vmem:[%s958 + $0x8] sm:$0xf]
    %v962 = vld [vmem:[%s958 + $0xc] sm:$0xf]
    %v963 = vld [vmem:[%s958 + $0x10] sm:$0xf]
    %v964 = vld [vmem:[%s958 + $0x14] sm:$0xf]
    %v965 = vld [vmem:[%s958 + $0x18] sm:$0xf]
    %v966 = vld [vmem:[%s958 + $0x1c] sm:$0xf]
    %v967 = vld [vmem:[%s958 + $0x20] sm:$0xf]
    %v968 = vld [vmem:[%s958 + $0x24] sm:$0xf]
    %v969 = vld [vmem:[%s958 + $0x28] sm:$0xf]
    %v970 = vld [vmem:[%s958 + $0x2c] sm:$0xf]
    %v971 = vld [vmem:[%s958 + $0x30] sm:$0xf]
    %v972 = vld [vmem:[%s958 + $0x34] sm:$0xf]
    %v973 = vld [vmem:[%s958 + $0x38] sm:$0xf]
    %v974 = vld [vmem:[%s958 + $0x3c] sm:$0xf]
    %v991 = vunpack.c.l.b16 %v959
    %v992 = vunpack.c.l.b16 %v960
    %v993 = vunpack.c.l.b16 %v961
    %v994 = vunpack.c.l.b16 %v962
    %v995 = vunpack.c.l.b16 %v963
    %v996 = vunpack.c.l.b16 %v964
    %v997 = vunpack.c.l.b16 %v965
    %v998 = vunpack.c.l.b16 %v966
    %v999 = vunpack.c.l.b16 %v967
    %v1000 = vunpack.c.l.b16 %v968
    %v1001 = vunpack.c.l.b16 %v969
    %v1002 = vunpack.c.l.b16 %v970
    %v1003 = vunpack.c.l.b16 %v971
    %v1004 = vunpack.c.l.b16 %v972
    %v1005 = vunpack.c.l.b16 %v973
    %v1006 = vunpack.c.l.b16 %v974
    %v1007 = vpack.c.b16 %v992, %v991
    %v1008 = vpack.c.b16 %v994, %v993
    %v1009 = vpack.c.b16 %v996, %v995
    %v1010 = vpack.c.b16 %v998, %v997
    %v1011 = vpack.c.b16 %v1000, %v999
    %v1012 = vpack.c.b16 %v1002, %v1001
    %v1013 = vpack.c.b16 %v1004, %v1003
    %v1014 = vpack.c.b16 %v1006, %v1005
    %1023 = vmatprep.subr.bf16.mxu0 0
    %1024 = vmatpush1.bf16.msra.mxu0 %v1014
    %1025 = vmatprep.subr.bf16.mxu0 0
    %1026 = vmatpush1.bf16.msra.mxu0 %v1013
    %1027 = vmatprep.subr.bf16.mxu0 0
    %1028 = vmatpush1.bf16.msra.mxu0 %v1012
    %1029 = vmatprep.subr.bf16.mxu0 0
    %1030 = vmatpush1.bf16.msra.mxu0 %v1011
    %1031 = vmatprep.subr.bf16.mxu0 0
    %1032 = vmatpush1.bf16.msra.mxu0 %v1010
    %1033 = vmatprep.subr.bf16.mxu0 0
    %1034 = vmatpush1.bf16.msra.mxu0 %v1009
    %1035 = vmatprep.subr.bf16.mxu0 0
    %1036 = vmatpush1.bf16.msra.mxu0 %v1008
    %1037 = vmatprep.subr.bf16.mxu0 0
    %1038 = vmatpush1.bf16.msra.mxu0 %v1007
    %1039 = vmatprep.subr.bf16.mxu0 0
    %1040 = vmatpush2.bf16.msra.mxu0 0
    %1041 = vmatprep.subr.bf16.mxu0 0
    %1042 = vmatpush2.bf16.msra.mxu0 0
    %1043 = vmatprep.subr.bf16.mxu0 0
    %1044 = vmatpush2.bf16.msra.mxu0 0
    %1045 = vmatprep.subr.bf16.mxu0 0
    %1046 = vmatpush2.bf16.msra.mxu0 0
    %1047 = vmatprep.subr.bf16.mxu0 0
    %1048 = vmatpush2.bf16.msra.mxu0 0
    %1049 = vmatprep.subr.bf16.mxu0 0
    %1050 = vmatpush2.bf16.msra.mxu0 0
    %1051 = vmatprep.subr.bf16.mxu0 0
    %1052 = vmatpush2.bf16.msra.mxu0 0
    %1053 = vmatprep.subr.bf16.mxu0 0
    %1054 = vmatpush2.bf16.msra.mxu0 0
    %1055 = vmatprep.mubr.bf16.mxu0 0
    %1056 = vmatmul.mubr.bf16.gmra.mxu0 %v957
    %v1057 = vpop.f32.mrf.mxu0
    %v1058 = vadd.f32 0.0, %v1057
    %v1059 = vpop.f32.mrf.mxu0
    %v1060 = vpop.f32.mrf.mxu0
    %v1061 = vadd.f32 0.0, %v1060
    %v1062 = vpop.f32.mrf.mxu0
    %1063 = vdwg.mxu0
    %v1064 = vadd.f32 %v1058, %v1061
    %v1065 = vrot.slane %v1064, 4
    %v1066 = vadd.f32 %v1064, %v1065
    %v1067 = vrot.slane %v1066, 2
    %v1068 = vadd.f32 %v1066, %v1067
    %v1069 = vrot.slane %v1068, 1
    %v1070 = vadd.f32 %v1068, %v1069
    %v1071 = vmul.f32 %v1070, %v450
    %v1072 = vmul.f32 %v1058, %v1058
    %v1073 = vmul.f32 %v1061, %v1061
    %v1074 = vadd.f32 %v1072, %v1073
    %v1075 = vrot.slane %v1074, 4
    %v1076 = vadd.f32 %v1074, %v1075
    %v1077 = vrot.slane %v1076, 2
    %v1078 = vadd.f32 %v1076, %v1077
    %v1079 = vrot.slane %v1078, 1
    %v1080 = vadd.f32 %v1078, %v1079
    %v1081 = vmul.f32 %v1080, %v450
    %v1082 = vmul.f32 %v1071, %v1071
    %v1083 = vsub.f32 %v1081, %v1082
    %v1084 = vmax.f32 %v1083, 0.0
    %v1085 = vsub.f32 %v1058, %v1071
    %v1086 = vsub.f32 %v1061, %v1071
    %v1087 = vadd.f32 %v1084, 1e-05
    %v1088 = vrsqrt.pop %v1087
    %v1089 = vmul.f32 %v1085, %v1088
    %v1090 = vmul.f32 %v1086, %v1088
    %v1091 = vlaneseq
    %v1092 = vshrl.u32 %v1091, 7
    %v1093 = vsub.s32 1, %v1092
    %v1094 = vrot.slane %v843, %v1093
    %v1095 = vmul.f32 %v1089, %v1094
    %v1096 = vmul.f32 %v1090, %v1094
    %v1097 = vlaneseq
    %v1098 = vshrl.u32 %v1097, 7
    %v1099 = vsub.s32 2, %v1098
    %v1100 = vrot.slane %v843, %v1099
    %v1101 = vadd.f32 %v1095, %v1100
    %v1102 = vadd.f32 %v1096, %v1100
    %v1103 = vld [vmem:[%s6] sm:$0x3]
    %v1105 = vsel %vm179, %v1103, 0
    %1107 = vmatprep.subr.mxu0 0.0
    %1108 = vmatpush1.msra.mxu0 0.0
    %1109 = vmatprep.subr.mxu0 0.0
    %1110 = vmatpush1.msra.mxu0 0.0
    %1111 = vmatprep.subr.mxu0 0.0
    %1112 = vmatpush1.msra.mxu0 0.0
    %1113 = vmatprep.subr.mxu0 0.0
    %1114 = vmatpush1.msra.mxu0 0.0
    %1115 = vmatprep.subr.mxu0 0.0
    %1116 = vmatpush1.msra.mxu0 0.0
    %1117 = vmatprep.subr.mxu0 0.0
    %1118 = vmatpush1.msra.mxu0 0.0
    %1119 = vmatprep.subr.mxu0 0.0
    %1120 = vmatpush1.msra.mxu0 0.0
    %1121 = vmatprep.subr.mxu0 0.0
    %1122 = vmatpush1.msra.mxu0 0.0
    %1123 = vmatprep.subr.mxu0 0.0
    %1124 = vmatpush1.msra.mxu0 0.0
    %1125 = vmatprep.subr.mxu0 0.0
    %1126 = vmatpush1.msra.mxu0 0.0
    %1127 = vmatprep.subr.mxu0 0.0
    %1128 = vmatpush1.msra.mxu0 0.0
    %1129 = vmatprep.subr.mxu0 0.0
    %1130 = vmatpush1.msra.mxu0 0.0
    %1131 = vmatprep.subr.mxu0 0.0
    %1132 = vmatpush1.msra.mxu0 0.0
    %1133 = vmatprep.subr.mxu0 0.0
    %1134 = vmatpush1.msra.mxu0 0.0
    %1135 = vmatprep.subr.mxu0 0.0
    %1136 = vmatpush1.msra.mxu0 %v1102
    %1137 = vmatprep.subr.mxu0 0.0
    %1138 = vmatpush1.msra.mxu0 %v1101
    %1139 = vmatprep.subr.mxu0 0.0
    %1140 = vmatpush2.msra.mxu0 0.0
    %1141 = vmatprep.subr.mxu0 0.0
    %1142 = vmatpush2.msra.mxu0 0.0
    %1143 = vmatprep.subr.mxu0 0.0
    %1144 = vmatpush2.msra.mxu0 0.0
    %1145 = vmatprep.subr.mxu0 0.0
    %1146 = vmatpush2.msra.mxu0 0.0
    %1147 = vmatprep.subr.mxu0 0.0
    %1148 = vmatpush2.msra.mxu0 0.0
    %1149 = vmatprep.subr.mxu0 0.0
    %1150 = vmatpush2.msra.mxu0 0.0
    %1151 = vmatprep.subr.mxu0 0.0
    %1152 = vmatpush2.msra.mxu0 0.0
    %1153 = vmatprep.subr.mxu0 0.0
    %1154 = vmatpush2.msra.mxu0 0.0
    %1155 = vmatprep.subr.mxu0 0.0
    %1156 = vmatpush2.msra.mxu0 0.0
    %1157 = vmatprep.subr.mxu0 0.0
    %1158 = vmatpush2.msra.mxu0 0.0
    %1159 = vmatprep.subr.mxu0 0.0
    %1160 = vmatpush2.msra.mxu0 0.0
    %1161 = vmatprep.subr.mxu0 0.0
    %1162 = vmatpush2.msra.mxu0 0.0
    %1163 = vmatprep.subr.mxu0 0.0
    %1164 = vmatpush2.msra.mxu0 0.0
    %1165 = vmatprep.subr.mxu0 0.0
    %1166 = vmatpush2.msra.mxu0 0.0
    %1167 = vmatprep.subr.mxu0 0.0
    %1168 = vmatpush2.msra.mxu0 0.0
    %1169 = vmatprep.subr.mxu0 0.0
    %1170 = vmatpush2.msra.mxu0 0.0
    %1171 = vmatprep.mubr.f32.mxu0 0.0
    %1172 = vmatmul.mubr.f32.gmra.mxu0 %v1105
    %v1173 = vpop.f32.mrf.mxu0
    %v1174 = vadd.f32 0.0, %v1173
    %v1175 = vpop.f32.mrf.mxu0
    %1176 = vdwg.mxu0
    %v1177 = vld [vmem:[%s10] sm:$0x7]
    %v1178 = vpack.c.bf16 %v1174, %v1174
    %v1179 = vld [vmem:[#allocation13] sm:$0xf]
    %v1180 = vld [vmem:[#allocation13 + $0x4] sm:$0xf]
    %v1181 = vld [vmem:[#allocation13 + $0x8] sm:$0xf]
    %v1182 = vld [vmem:[#allocation13 + $0xc] sm:$0xf]
    %v1183 = vld [vmem:[#allocation13 + $0x10] sm:$0xf]
    %v1184 = vld [vmem:[#allocation13 + $0x14] sm:$0xf]
    %v1185 = vld [vmem:[#allocation13 + $0x18] sm:$0xf]
    %v1186 = vld [vmem:[#allocation13 + $0x1c] sm:$0xf]
    %v1187 = vld [vmem:[#allocation13 + $0x20] sm:$0xf]
    %v1188 = vld [vmem:[#allocation13 + $0x24] sm:$0xf]
    %v1189 = vld [vmem:[#allocation13 + $0x28] sm:$0xf]
    %v1190 = vld [vmem:[#allocation13 + $0x2c] sm:$0xf]
    %v1191 = vld [vmem:[#allocation13 + $0x30] sm:$0xf]
    %v1192 = vld [vmem:[#allocation13 + $0x34] sm:$0xf]
    %v1193 = vld [vmem:[#allocation13 + $0x38] sm:$0xf]
    %v1194 = vld [vmem:[#allocation13 + $0x3c] sm:$0xf]
    %v1195 = vlaneseq
    %v1196 = vshrl.u32 %v1195, 7
    %v1197 = vsub.s32 0, %v1196
    %v1198 = vrot.slane %v1177, %v1197
    %v1215 = vunpack.c.l.b16 %v1179
    %v1216 = vunpack.c.l.b16 %v1180
    %v1217 = vunpack.c.l.b16 %v1181
    %v1218 = vunpack.c.l.b16 %v1182
    %v1219 = vunpack.c.l.b16 %v1183
    %v1220 = vunpack.c.l.b16 %v1184
    %v1221 = vunpack.c.l.b16 %v1185
    %v1222 = vunpack.c.l.b16 %v1186
    %v1223 = vunpack.c.l.b16 %v1187
    %v1224 = vunpack.c.l.b16 %v1188
    %v1225 = vunpack.c.l.b16 %v1189
    %v1226 = vunpack.c.l.b16 %v1190
    %v1227 = vunpack.c.l.b16 %v1191
    %v1228 = vunpack.c.l.b16 %v1192
    %v1229 = vunpack.c.l.b16 %v1193
    %v1230 = vunpack.c.l.b16 %v1194
    %v1231 = vpack.c.b16 %v1216, %v1215
    %v1232 = vpack.c.b16 %v1218, %v1217
    %v1233 = vpack.c.b16 %v1220, %v1219
    %v1234 = vpack.c.b16 %v1222, %v1221
    %v1235 = vpack.c.b16 %v1224, %v1223
    %v1236 = vpack.c.b16 %v1226, %v1225
    %v1237 = vpack.c.b16 %v1228, %v1227
    %v1238 = vpack.c.b16 %v1230, %v1229
    %1247 = vmatprep.subr.bf16.mxu0 0
    %1248 = vmatpush1.bf16.msra.mxu0 %v1238
    %1249 = vmatprep.subr.bf16.mxu0 0
    %1250 = vmatpush1.bf16.msra.mxu0 %v1237
    %1251 = vmatprep.subr.bf16.mxu0 0
    %1252 = vmatpush1.bf16.msra.mxu0 %v1236
    %1253 = vmatprep.subr.bf16.mxu0 0
    %1254 = vmatpush1.bf16.msra.mxu0 %v1235
    %1255 = vmatprep.subr.bf16.mxu0 0
    %1256 = vmatpush1.bf16.msra.mxu0 %v1234
    %1257 = vmatprep.subr.bf16.mxu0 0
    %1258 = vmatpush1.bf16.msra.mxu0 %v1233
    %1259 = vmatprep.subr.bf16.mxu0 0
    %1260 = vmatpush1.bf16.msra.mxu0 %v1232
    %1261 = vmatprep.subr.bf16.mxu0 0
    %1262 = vmatpush1.bf16.msra.mxu0 %v1231
    %1263 = vmatprep.subr.bf16.mxu0 0
    %1264 = vmatpush2.bf16.msra.mxu0 0
    %1265 = vmatprep.subr.bf16.mxu0 0
    %1266 = vmatpush2.bf16.msra.mxu0 0
    %1267 = vmatprep.subr.bf16.mxu0 0
    %1268 = vmatpush2.bf16.msra.mxu0 0
    %1269 = vmatprep.subr.bf16.mxu0 0
    %1270 = vmatpush2.bf16.msra.mxu0 0
    %1271 = vmatprep.subr.bf16.mxu0 0
    %1272 = vmatpush2.bf16.msra.mxu0 0
    %1273 = vmatprep.subr.bf16.mxu0 0
    %1274 = vmatpush2.bf16.msra.mxu0 0
    %1275 = vmatprep.subr.bf16.mxu0 0
    %1276 = vmatpush2.bf16.msra.mxu0 0
    %1277 = vmatprep.subr.bf16.mxu0 0
    %1278 = vmatpush2.bf16.msra.mxu0 0
    %1279 = vmatprep.mubr.bf16.mxu0 0
    %1280 = vmatmul.mubr.bf16.gmra.mxu0 %v1178
    %v1281 = vpop.f32.mrf.mxu0
    %v1282 = vadd.f32 %v1198, %v1281
    %v1283 = vpop.f32.mrf.mxu0
    %v1284 = vpop.f32.mrf.mxu0
    %v1285 = vpop.f32.mrf.mxu0
    %1286 = vdwg.mxu0
    %1287 = vst [vmem:[#allocation17] sm:$0x3] %v1282
    %v1288 = vpack.c.bf16 %v1282, %v1282
    %v1289 = vld [vmem:[#allocation14] sm:$0xf]
    %v1290 = vld [vmem:[#allocation14 + $0x4] sm:$0xf]
    %v1291 = vld [vmem:[#allocation14 + $0x8] sm:$0xf]
    %v1292 = vld [vmem:[#allocation14 + $0xc] sm:$0xf]
    %v1293 = vld [vmem:[#allocation14 + $0x10] sm:$0xf]
    %v1294 = vld [vmem:[#allocation14 + $0x14] sm:$0xf]
    %v1295 = vld [vmem:[#allocation14 + $0x18] sm:$0xf]
    %v1296 = vld [vmem:[#allocation14 + $0x1c] sm:$0xf]
    %v1297 = vld [vmem:[#allocation14 + $0x20] sm:$0xf]
    %v1298 = vld [vmem:[#allocation14 + $0x24] sm:$0xf]
    %v1299 = vld [vmem:[#allocation14 + $0x28] sm:$0xf]
    %v1300 = vld [vmem:[#allocation14 + $0x2c] sm:$0xf]
    %v1301 = vld [vmem:[#allocation14 + $0x30] sm:$0xf]
    %v1302 = vld [vmem:[#allocation14 + $0x34] sm:$0xf]
    %v1303 = vld [vmem:[#allocation14 + $0x38] sm:$0xf]
    %v1304 = vld [vmem:[#allocation14 + $0x3c] sm:$0xf]
    %v1305 = vlaneseq
    %v1306 = vshrl.u32 %v1305, 7
    %v1307 = vsub.s32 1, %v1306
    %v1308 = vrot.slane %v1177, %v1307
    %v1325 = vunpack.c.l.b16 %v1289
    %v1326 = vunpack.c.l.b16 %v1290
    %v1327 = vunpack.c.l.b16 %v1291
    %v1328 = vunpack.c.l.b16 %v1292
    %v1329 = vunpack.c.l.b16 %v1293
    %v1330 = vunpack.c.l.b16 %v1294
    %v1331 = vunpack.c.l.b16 %v1295
    %v1332 = vunpack.c.l.b16 %v1296
    %v1333 = vunpack.c.l.b16 %v1297
    %v1334 = vunpack.c.l.b16 %v1298
    %v1335 = vunpack.c.l.b16 %v1299
    %v1336 = vunpack.c.l.b16 %v1300
    %v1337 = vunpack.c.l.b16 %v1301
    %v1338 = vunpack.c.l.b16 %v1302
    %v1339 = vunpack.c.l.b16 %v1303
    %v1340 = vunpack.c.l.b16 %v1304
    %v1341 = vpack.c.b16 %v1326, %v1325
    %v1342 = vpack.c.b16 %v1328, %v1327
    %v1343 = vpack.c.b16 %v1330, %v1329
    %v1344 = vpack.c.b16 %v1332, %v1331
    %v1345 = vpack.c.b16 %v1334, %v1333
    %v1346 = vpack.c.b16 %v1336, %v1335
    %v1347 = vpack.c.b16 %v1338, %v1337
    %v1348 = vpack.c.b16 %v1340, %v1339
    %1357 = vmatprep.subr.bf16.mxu0 0
    %1358 = vmatpush1.bf16.msra.mxu0 %v1348
    %1359 = vmatprep.subr.bf16.mxu0 0
    %1360 = vmatpush1.bf16.msra.mxu0 %v1347
    %1361 = vmatprep.subr.bf16.mxu0 0
    %1362 = vmatpush1.bf16.msra.mxu0 %v1346
    %1363 = vmatprep.subr.bf16.mxu0 0
    %1364 = vmatpush1.bf16.msra.mxu0 %v1345
    %1365 = vmatprep.subr.bf16.mxu0 0
    %1366 = vmatpush1.bf16.msra.mxu0 %v1344
    %1367 = vmatprep.subr.bf16.mxu0 0
    %1368 = vmatpush1.bf16.msra.mxu0 %v1343
    %1369 = vmatprep.subr.bf16.mxu0 0
    %1370 = vmatpush1.bf16.msra.mxu0 %v1342
    %1371 = vmatprep.subr.bf16.mxu0 0
    %1372 = vmatpush1.bf16.msra.mxu0 %v1341
    %1373 = vmatprep.subr.bf16.mxu0 0
    %1374 = vmatpush2.bf16.msra.mxu0 0
    %1375 = vmatprep.subr.bf16.mxu0 0
    %1376 = vmatpush2.bf16.msra.mxu0 0
    %1377 = vmatprep.subr.bf16.mxu0 0
    %1378 = vmatpush2.bf16.msra.mxu0 0
    %1379 = vmatprep.subr.bf16.mxu0 0
    %1380 = vmatpush2.bf16.msra.mxu0 0
    %1381 = vmatprep.subr.bf16.mxu0 0
    %1382 = vmatpush2.bf16.msra.mxu0 0
    %1383 = vmatprep.subr.bf16.mxu0 0
    %1384 = vmatpush2.bf16.msra.mxu0 0
    %1385 = vmatprep.subr.bf16.mxu0 0
    %1386 = vmatpush2.bf16.msra.mxu0 0
    %1387 = vmatprep.subr.bf16.mxu0 0
    %1388 = vmatpush2.bf16.msra.mxu0 0
    %1389 = vmatprep.mubr.bf16.mxu0 0
    %1390 = vmatmul.mubr.bf16.gmra.mxu0 %v1288
    %v1391 = vpop.f32.mrf.mxu0
    %v1392 = vadd.f32 %v1308, %v1391
    %v1393 = vpop.f32.mrf.mxu0
    %v1394 = vpop.f32.mrf.mxu0
    %v1395 = vpop.f32.mrf.mxu0
    %1396 = vdwg.mxu0
    %v1397 = vmax.f32 %v1392, 0.0
    %v1398 = vpack.c.bf16 %v1397, %v1397
    %v1399 = vld [vmem:[#allocation16] sm:$0xf]
    %v1400 = vld [vmem:[#allocation16 + $0x4] sm:$0xf]
    %v1401 = vld [vmem:[#allocation16 + $0x8] sm:$0xf]
    %v1402 = vld [vmem:[#allocation16 + $0xc] sm:$0xf]
    %v1403 = vld [vmem:[#allocation16 + $0x10] sm:$0xf]
    %v1404 = vld [vmem:[#allocation16 + $0x14] sm:$0xf]
    %v1405 = vld [vmem:[#allocation16 + $0x18] sm:$0xf]
    %v1406 = vld [vmem:[#allocation16 + $0x1c] sm:$0xf]
    %v1407 = vld [vmem:[#allocation16 + $0x20] sm:$0xf]
    %v1408 = vld [vmem:[#allocation16 + $0x24] sm:$0xf]
    %v1409 = vld [vmem:[#allocation16 + $0x28] sm:$0xf]
    %v1410 = vld [vmem:[#allocation16 + $0x2c] sm:$0xf]
    %v1411 = vld [vmem:[#allocation16 + $0x30] sm:$0xf]
    %v1412 = vld [vmem:[#allocation16 + $0x34] sm:$0xf]
    %v1413 = vld [vmem:[#allocation16 + $0x38] sm:$0xf]
    %v1414 = vld [vmem:[#allocation16 + $0x3c] sm:$0xf]
    %v1415 = vlaneseq
    %v1416 = vshrl.u32 %v1415, 7
    %v1417 = vsub.s32 2, %v1416
    %v1418 = vrot.slane %v1177, %v1417
    %v1435 = vunpack.c.l.b16 %v1399
    %v1436 = vunpack.c.l.b16 %v1400
    %v1437 = vunpack.c.l.b16 %v1401
    %v1438 = vunpack.c.l.b16 %v1402
    %v1439 = vunpack.c.l.b16 %v1403
    %v1440 = vunpack.c.l.b16 %v1404
    %v1441 = vunpack.c.l.b16 %v1405
    %v1442 = vunpack.c.l.b16 %v1406
    %v1443 = vunpack.c.l.b16 %v1407
    %v1444 = vunpack.c.l.b16 %v1408
    %v1445 = vunpack.c.l.b16 %v1409
    %v1446 = vunpack.c.l.b16 %v1410
    %v1447 = vunpack.c.l.b16 %v1411
    %v1448 = vunpack.c.l.b16 %v1412
    %v1449 = vunpack.c.l.b16 %v1413
    %v1450 = vunpack.c.l.b16 %v1414
    %v1451 = vpack.c.b16 %v1436, %v1435
    %v1452 = vpack.c.b16 %v1438, %v1437
    %v1453 = vpack.c.b16 %v1440, %v1439
    %v1454 = vpack.c.b16 %v1442, %v1441
    %v1455 = vpack.c.b16 %v1444, %v1443
    %v1456 = vpack.c.b16 %v1446, %v1445
    %v1457 = vpack.c.b16 %v1448, %v1447
    %v1458 = vpack.c.b16 %v1450, %v1449
    %1467 = vmatprep.subr.bf16.mxu0 0
    %1468 = vmatpush1.bf16.msra.mxu0 %v1458
    %1469 = vmatprep.subr.bf16.mxu0 0
    %1470 = vmatpush1.bf16.msra.mxu0 %v1457
    %1471 = vmatprep.subr.bf16.mxu0 0
    %1472 = vmatpush1.bf16.msra.mxu0 %v1456
    %1473 = vmatprep.subr.bf16.mxu0 0
    %1474 = vmatpush1.bf16.msra.mxu0 %v1455
    %1475 = vmatprep.subr.bf16.mxu0 0
    %1476 = vmatpush1.bf16.msra.mxu0 %v1454
    %1477 = vmatprep.subr.bf16.mxu0 0
    %1478 = vmatpush1.bf16.msra.mxu0 %v1453
    %1479 = vmatprep.subr.bf16.mxu0 0
    %1480 = vmatpush1.bf16.msra.mxu0 %v1452
    %1481 = vmatprep.subr.bf16.mxu0 0
    %1482 = vmatpush1.bf16.msra.mxu0 %v1451
    %1483 = vmatprep.subr.bf16.mxu0 0
    %1484 = vmatpush2.bf16.msra.mxu0 0
    %1485 = vmatprep.subr.bf16.mxu0 0
    %1486 = vmatpush2.bf16.msra.mxu0 0
    %1487 = vmatprep.subr.bf16.mxu0 0
    %1488 = vmatpush2.bf16.msra.mxu0 0
    %1489 = vmatprep.subr.bf16.mxu0 0
    %1490 = vmatpush2.bf16.msra.mxu0 0
    %1491 = vmatprep.subr.bf16.mxu0 0
    %1492 = vmatpush2.bf16.msra.mxu0 0
    %1493 = vmatprep.subr.bf16.mxu0 0
    %1494 = vmatpush2.bf16.msra.mxu0 0
    %1495 = vmatprep.subr.bf16.mxu0 0
    %1496 = vmatpush2.bf16.msra.mxu0 0
    %1497 = vmatprep.subr.bf16.mxu0 0
    %1498 = vmatpush2.bf16.msra.mxu0 0
    %1499 = vmatprep.mubr.bf16.mxu0 0
    %1500 = vmatmul.mubr.bf16.gmra.mxu0 %v1398
    %v1501 = vpop.f32.mrf.mxu0
    %v1502 = vadd.f32 %v1418, %v1501
    %v1503 = vpop.f32.mrf.mxu0
    %v1504 = vpop.f32.mrf.mxu0
    %v1505 = vpop.f32.mrf.mxu0
    %1506 = vdwg.mxu0
    %1507 = vst [vmem:[#allocation18] sm:$0x3] %v1502
    // Predicated region
    $region82: #{tpu_custom_call.1} parent=1 // pred_check
      _
    $region83: #{tpu_custom_call.1} parent=1 // pred_check_branch
      %1509 = sbr.rel (0) target = $region85
    $region84: #{tpu_custom_call.1} parent=1 // pred_region
      %s1511 = ssub.s32 32, 32
      %1512 = vsyncadd [#allocation4], %s1511
      %s1514 = sshll.u32 [#allocation17], 4
      %s1515 = int_to_ptr.vmem [resolvable:$true] %s1514
      %1517 = dma.vmem_to_hbm [thread:$0]  %s1515, 32, %s11, [#allocation4]
    $region85: #{tpu_custom_call.1} parent=1 // pred_fallthru
      _
    // Predicated region
    $region86: #{tpu_custom_call.1} parent=1 // pred_check
      _
    $region87: #{tpu_custom_call.1} parent=1 // pred_check_branch
      %1519 = sbr.rel (0) target = $region89
    $region88: #{tpu_custom_call.1} parent=1 // pred_region
      %s1521 = ssub.s32 32, 32
      %1522 = vsyncadd [#allocation19], %s1521
      %s1524 = sshll.u32 [#allocation18], 4
      %s1525 = int_to_ptr.vmem [resolvable:$true] %s1524
      %1527 = dma.vmem_to_hbm [thread:$0]  %s1525, 32, %s12, [#allocation19]
    $region89: #{tpu_custom_call.1} parent=1 // pred_fallthru
      _
    // Predicated region
    $region90: #{tpu_custom_call.1} parent=1 // pred_check
      _
    $region91: #{tpu_custom_call.1} parent=1 // pred_check_branch
      %1529 = sbr.rel (0) target = $region93
    $region92: #{tpu_custom_call.1} parent=1 // pred_region
      %1530 = dma.done [#allocation4], 32
    $region93: #{tpu_custom_call.1} parent=1 // pred_fallthru
      _
    // Predicated region
    $region94: #{tpu_custom_call.1} parent=1 // pred_check
      _
    $region95: #{tpu_custom_call.1} parent=1 // pred_check_branch
      %1532 = sbr.rel (0) target = $region97
    $region96: #{tpu_custom_call.1} parent=1 // pred_region
      %1533 = dma.done [#allocation19], 32
    $region97: #{tpu_custom_call.1} parent=1 // pred_fallthru
      _
    %1534 = vsyncpa [#allocation3], 1
    %1535 = vsyncpa [#allocation6], 1
    %1536 = vsyncpa [#allocation9], 1
    %1537 = vsyncpa [#allocation12], 1
    %1538 = vsyncpa [#allocation15], 1
    %1539 = vsyncpa [#allocation4], 1
    %1540 = vsyncpa [#allocation19], 1

</llo_original>
